<compile_context>
chip_gen: v7x
topology: tpu7x:2x2x1
jax: 0.10.0
libtpu: 0.0.40
codegen_flags: <defaults>
</compile_context>

<pallas_src>
import functools

import jax
import jax.numpy as jnp
from jax.experimental import pallas as pl
from jax.experimental.pallas import tpu as pltpu

H1 = 100
H2 = 100
LN_EPS = 1e-5
LEAKY_SLOPE = 0.01      # PyTorch nn.LeakyReLU default

VEC_LANES = 128         # one lane-tile; holds H1/H2 (=100) and op_dim (<=128)
VEC_ROWS = 8            # one sublane-tile; rows 0..6 used, row 7 padding
# row layout: 0=b1, 1=ln1.gamma, 2=ln1.beta, 3=b2, 4=ln2.gamma, 5=ln2.beta, 6=b3


def _leaky_relu(x):
    return jnp.where(x > 0, x, LEAKY_SLOPE * x)


def _layernorm(x, gamma, beta):
    # Single-pass statistics: mean and mean-of-squares together,
    # var = E[x^2] - mean^2 (fine in f32 at these magnitudes).
    mean = jnp.mean(x, axis=-1, keepdims=True)
    mean_sq = jnp.mean(x * x, axis=-1, keepdims=True)
    var = mean_sq - mean * mean
    inv = jax.lax.rsqrt(var + LN_EPS)
    return (x - mean) * inv * gamma + beta


def _rt_nw_kernel(x_ref, w1_ref, w2_ref, w3_ref, vec_ref, o_ref, *,
                  use_bf16_matmul=False):
    """One edge-block of the ensemble.

    x_ref  : (eblk, B, ip)        edge-major activations
    w1_ref : (eblk, ip, H1)
    w2_ref : (eblk, H1, H2)
    w3_ref : (eblk, H2, op)
    vec_ref: (eblk, 8, 128)       packed bias / LN vectors (see row layout)
    o_ref  : (eblk, B, op)
    """
    op_dim = o_ref.shape[-1]

    vec = vec_ref[...]                       # (eblk, 8, 128)
    b1 = vec[:, 0:1, :H1]
    g1 = vec[:, 1:2, :H1]
    be1 = vec[:, 2:3, :H1]
    b2 = vec[:, 3:4, :H2]
    g2 = vec[:, 4:5, :H2]
    be2 = vec[:, 5:6, :H2]
    b3 = vec[:, 6:7, :op_dim]

    def cast(a):
        return a.astype(jnp.bfloat16) if use_bf16_matmul else a

    x = x_ref[...]                           # (eblk, B, ip)

    # --- layer 1: Linear(ip -> H1) + LeakyReLU + LayerNorm ---
    h = jnp.einsum('ebi,eio->ebo', cast(x), cast(w1_ref[...]),
                   preferred_element_type=jnp.float32) + b1
    h = _leaky_relu(h)
    h = _layernorm(h, g1, be1)
    # Dropout -> identity (inference)

    # --- layer 2: Linear(H1 -> H2) + LeakyReLU + LayerNorm ---
    h = jnp.einsum('ebh,eho->ebo', cast(h), cast(w2_ref[...]),
                   preferred_element_type=jnp.float32) + b2
    h = _leaky_relu(h)
    h = _layernorm(h, g2, be2)
    # Dropout -> identity (inference)

    # --- output layer: Linear(H2 -> op) ---
    out = jnp.einsum('ebh,eho->ebo', cast(h), cast(w3_ref[...]),
                     preferred_element_type=jnp.float32) + b3
    o_ref[...] = out.astype(o_ref.dtype)


def _pick_edge_block(num_edges, max_edges_per_step):
    """Largest divisor of num_edges that is <= max_edges_per_step."""
    if num_edges <= max_edges_per_step:
        return num_edges
    for eb in range(max_edges_per_step, 0, -1):
        if num_edges % eb == 0:
            return eb
    return 1


def _pack_vectors(params, op_dim):
    """Pack the 7 per-edge (1, dim) vectors into one (E, 8, 128) f32 tile."""
    E = params["w1"].shape[0]

    def pad(v, width):
        return jnp.pad(v.astype(jnp.float32),
                       ((0, 0), (0, 0), (0, VEC_LANES - width)))

    rows = [
        pad(params["b1"], H1), pad(params["g1"], H1), pad(params["be1"], H1),
        pad(params["b2"], H2), pad(params["g2"], H2), pad(params["be2"], H2),
        pad(params["b3"], op_dim),
        jnp.zeros((E, 1, VEC_LANES), jnp.float32),
    ]
    return jnp.concatenate(rows, axis=1)     # (E, 8, 128)


def rt_nw_forward(x_bed, params, *, max_edges_per_step=32,
                  use_bf16_matmul=False):
    """x_bed: (batch, num_edges, ip_dim) float32, like the PyTorch input.

    Returns (batch, num_edges, op_dim), matching rt_nw.forward exactly
    (including its cat-then-reshape row interleaving quirk).
    """
    B, E, ip_dim = x_bed.shape
    op_dim = params["w3"].shape[-1]
    assert max(H1, H2, op_dim) <= VEC_LANES, "packed-vector tile too narrow"

    eblk = _pick_edge_block(E, max_edges_per_step)
    grid = (E // eblk,)

    # Edge-major activations for the leading-batch-dim batched matmuls.
    # Negligible traffic vs. the per-edge weights (see header comment).
    x_ebi = jnp.transpose(x_bed, (1, 0, 2))            # (E, B, ip)

    vecs = _pack_vectors(params, op_dim)               # (E, 8, 128)

    kernel = functools.partial(_rt_nw_kernel, use_bf16_matmul=use_bf16_matmul)

    # VMEM budget (per step, double-buffered), f32, eblk=32, ip=16:
    #   x 16KB + w1 204KB + w2 1.25MB + w3 100KB + vec 128KB + out 8KB
    #   ~= 1.7MB * 2 ~= 3.4MB  -> comfortably under v5e's 16MiB default limit.
    out_ebo = pl.pallas_call(
        kernel,
        out_shape=jax.ShapeDtypeStruct((E, B, op_dim), jnp.float32),
        grid=grid,
        in_specs=[
            pl.BlockSpec((eblk, B, ip_dim), lambda g: (g, 0, 0)),       # x
            pl.BlockSpec((eblk, ip_dim, H1), lambda g: (g, 0, 0)),      # w1
            pl.BlockSpec((eblk, H1, H2), lambda g: (g, 0, 0)),          # w2
            pl.BlockSpec((eblk, H2, op_dim), lambda g: (g, 0, 0)),      # w3
            pl.BlockSpec((eblk, VEC_ROWS, VEC_LANES), lambda g: (g, 0, 0)),
        ],
        out_specs=pl.BlockSpec((eblk, B, op_dim), lambda g: (g, 0, 0)),
        compiler_params=pltpu.CompilerParams(
            dimension_semantics=("parallel",)),        # edge-blocks independent
    )(x_ebi, params["w1"], params["w2"], params["w3"], vecs)

    # PyTorch: tmp_op = cat over edges along dim 0 -> (E*B, op) edge-major,
    # then .reshape(B, E, op).  A flat reshape of the edge-major (E, B, op)
    # stack reproduces this exactly (including the row interleaving quirk).
    return out_ebo.reshape(B, E, op_dim)


def init_params(key, num_edges, ip_dim, op_dim):
    """Deterministic synthetic init (PyTorch-Linear-style uniform bounds)."""
    ks = jax.random.split(key, 6)

    def lin(kw, kb, e, fan_in, fan_out):
        bound = 1.0 / jnp.sqrt(jnp.float32(fan_in))
        w = jax.random.uniform(kw, (e, fan_in, fan_out), jnp.float32, -bound, bound)
        b = jax.random.uniform(kb, (e, 1, fan_out), jnp.float32, -bound, bound)
        return w, b

    w1, b1 = lin(ks[0], ks[1], num_edges, ip_dim, H1)
    w2, b2 = lin(ks[2], ks[3], num_edges, H1, H2)
    w3, b3 = lin(ks[4], ks[5], num_edges, H2, op_dim)
    return {
        "w1": w1, "b1": b1,
        "g1": jnp.ones((num_edges, 1, H1), jnp.float32),
        "be1": jnp.zeros((num_edges, 1, H1), jnp.float32),
        "w2": w2, "b2": b2,
        "g2": jnp.ones((num_edges, 1, H2), jnp.float32),
        "be2": jnp.zeros((num_edges, 1, H2), jnp.float32),
        "w3": w3, "b3": b3,
    }


def _layernorm_ref(x, gamma, beta):
    mean = jnp.mean(x, axis=-1, keepdims=True)
    var = jnp.mean((x - mean) * (x - mean), axis=-1, keepdims=True)
    return (x - mean) * jax.lax.rsqrt(var + LN_EPS) * gamma + beta


def _reference_forward(x_bed, params):
    """Pure-JAX reference reproducing the PyTorch loop semantics."""
    B, E, _ = x_bed.shape
    op_dim = params["w3"].shape[-1]
    outs = []
    for e in range(E):
        x = x_bed[:, e, :]
        h = x @ params["w1"][e] + params["b1"][e]
        h = _leaky_relu(h)
        h = _layernorm_ref(h, params["g1"][e], params["be1"][e])
        h = h @ params["w2"][e] + params["b2"][e]
        h = _leaky_relu(h)
        h = _layernorm_ref(h, params["g2"][e], params["be2"][e])
        h = h @ params["w3"][e] + params["b3"][e]
        outs.append(h)
    tmp = jnp.concatenate(outs, axis=0)      # (E*B, op_dim), edge-major
    return tmp.reshape(B, E, op_dim)


if __name__ == "__main__":
    # Small shapes consistent with the module: batch=8, num_edges=4,
    # ip_dim=16, op_dim=8, hidden dims fixed at 100.
    batch, num_edges, ip_dim, op_dim = 8, 4, 16, 8

    key = jax.random.PRNGKey(0)
    kx, kp = jax.random.split(key)
    x = jax.random.normal(kx, (batch, num_edges, ip_dim), jnp.float32)
    params = init_params(kp, num_edges, ip_dim, op_dim)

    fwd = jax.jit(rt_nw_forward)
    out = jax.block_until_ready(fwd(x, params))

    ref = _reference_forward(x, params)
    assert out.shape == (batch, num_edges, op_dim)
    assert jnp.allclose(out, ref, atol=1e-4, rtol=1e-4), float(
        jnp.max(jnp.abs(out - ref)))

    print("KERNEL_OK")
</pallas_src>

<mosaic_0001>
module attributes {stable_mosaic.version = 11 : i64} {
  func.func @_rt_nw_kernel(%arg0: i32, %arg1: memref<4x8x16xf32, #tpu.memory_space<vmem>>, %arg2: memref<4x16x100xf32, #tpu.memory_space<vmem>>, %arg3: memref<4x100x100xf32, #tpu.memory_space<vmem>>, %arg4: memref<4x100x8xf32, #tpu.memory_space<vmem>>, %arg5: memref<4x8x128xf32, #tpu.memory_space<vmem>>, %arg6: memref<4x8x8xf32, #tpu.memory_space<vmem>>) attributes {dimension_semantics = [#tpu.dimension_semantics<parallel>], iteration_bounds = array<i64: 1>, scalar_prefetch = 0 : i64, scratch_operands = 0 : i64, tpu.core_type = #tpu.core_type<tc>, window_params = [{transform_indices = @transform_0, window_bounds = array<i64: 4, 8, 16>}, {transform_indices = @transform_1, window_bounds = array<i64: 4, 16, 100>}, {transform_indices = @transform_2, window_bounds = array<i64: 4, 100, 100>}, {transform_indices = @transform_3, window_bounds = array<i64: 4, 100, 8>}, {transform_indices = @transform_4, window_bounds = array<i64: 4, 8, 128>}, {transform_indices = @transform_5, window_bounds = array<i64: 4, 8, 8>}]} {
    %c0 = arith.constant 0 : index
    %c0_0 = arith.constant 0 : index
    %c0_1 = arith.constant 0 : index
    %0 = vector.load %arg5[%c0, %c0_0, %c0_1] : memref<4x8x128xf32, #tpu.memory_space<vmem>>, vector<4x8x128xf32>
    %1 = vector.extract_strided_slice %0 {offsets = [0, 0, 0], sizes = [4, 1, 100], strides = [1, 1, 1]} : vector<4x8x128xf32> to vector<4x1x100xf32>
    %2 = vector.extract_strided_slice %0 {offsets = [0, 1, 0], sizes = [4, 1, 100], strides = [1, 1, 1]} : vector<4x8x128xf32> to vector<4x1x100xf32>
    %3 = vector.extract_strided_slice %0 {offsets = [0, 2, 0], sizes = [4, 1, 100], strides = [1, 1, 1]} : vector<4x8x128xf32> to vector<4x1x100xf32>
    %4 = vector.extract_strided_slice %0 {offsets = [0, 3, 0], sizes = [4, 1, 100], strides = [1, 1, 1]} : vector<4x8x128xf32> to vector<4x1x100xf32>
    %5 = vector.extract_strided_slice %0 {offsets = [0, 4, 0], sizes = [4, 1, 100], strides = [1, 1, 1]} : vector<4x8x128xf32> to vector<4x1x100xf32>
    %6 = vector.extract_strided_slice %0 {offsets = [0, 5, 0], sizes = [4, 1, 100], strides = [1, 1, 1]} : vector<4x8x128xf32> to vector<4x1x100xf32>
    %7 = vector.extract_strided_slice %0 {offsets = [0, 6, 0], sizes = [4, 1, 8], strides = [1, 1, 1]} : vector<4x8x128xf32> to vector<4x1x8xf32>
    %c0_2 = arith.constant 0 : index
    %c0_3 = arith.constant 0 : index
    %c0_4 = arith.constant 0 : index
    %8 = vector.load %arg1[%c0_2, %c0_3, %c0_4] : memref<4x8x16xf32, #tpu.memory_space<vmem>>, vector<4x8x16xf32>
    %c0_5 = arith.constant 0 : index
    %c0_6 = arith.constant 0 : index
    %c0_7 = arith.constant 0 : index
    %9 = vector.load %arg2[%c0_5, %c0_6, %c0_7] : memref<4x16x100xf32, #tpu.memory_space<vmem>>, vector<4x16x100xf32>
    "tpu.trace_start"() <{level = 10 : i32, message = "ebi,eio->ebo"}> : () -> ()
    %cst = arith.constant dense<0.000000e+00> : vector<4x8x100xf32>
    %10 = tpu.matmul %8, %9, %cst {dimension_numbers = #tpu.dot_dimension_numbers<[2], [1], [1], [2], [0, 0, 0, 1, 1, 2], [0], [0]>} : vector<4x8x16xf32>, vector<4x16x100xf32>, vector<4x8x100xf32> -> vector<4x8x100xf32>
    "tpu.trace_stop"() : () -> ()
    %11 = vector.broadcast %1 : vector<4x1x100xf32> to vector<4x8x100xf32>
    %12 = arith.addf %10, %11 : vector<4x8x100xf32>
    %cst_8 = arith.constant 0.000000e+00 : f32
    %13 = vector.broadcast %cst_8 : f32 to vector<4x8x100xf32>
    %14 = arith.cmpf ogt, %12, %13 : vector<4x8x100xf32>
    %cst_9 = arith.constant 0.00999999977 : f32
    %15 = vector.broadcast %cst_9 : f32 to vector<4x8x100xf32>
    %16 = arith.mulf %15, %12 : vector<4x8x100xf32>
    %17 = arith.select %14, %12, %16 : vector<4x8x100xi1>, vector<4x8x100xf32>
    %cst_10 = arith.constant dense<0.000000e+00> : vector<4x8xf32>
    %18 = vector.multi_reduction <add>, %17, %cst_10 [2] : vector<4x8x100xf32> to vector<4x8xf32>
    %19 = vector.shape_cast %18 : vector<4x8xf32> to vector<4x8x1xf32>
    %cst_11 = arith.constant 1.000000e+02 : f32
    %20 = vector.broadcast %cst_11 : f32 to vector<4x8x1xf32>
    %21 = arith.divf %19, %20 : vector<4x8x1xf32>
    %22 = arith.mulf %17, %17 : vector<4x8x100xf32>
    %cst_12 = arith.constant dense<0.000000e+00> : vector<4x8xf32>
    %23 = vector.multi_reduction <add>, %22, %cst_12 [2] : vector<4x8x100xf32> to vector<4x8xf32>
    %24 = vector.shape_cast %23 : vector<4x8xf32> to vector<4x8x1xf32>
    %cst_13 = arith.constant 1.000000e+02 : f32
    %25 = vector.broadcast %cst_13 : f32 to vector<4x8x1xf32>
    %26 = arith.divf %24, %25 : vector<4x8x1xf32>
    %27 = arith.mulf %21, %21 : vector<4x8x1xf32>
    %28 = arith.subf %26, %27 : vector<4x8x1xf32>
    %cst_14 = arith.constant 9.99999974E-6 : f32
    %29 = vector.broadcast %cst_14 : f32 to vector<4x8x1xf32>
    %30 = arith.addf %28, %29 : vector<4x8x1xf32>
    %31 = math.rsqrt %30 : vector<4x8x1xf32>
    %32 = vector.broadcast %21 : vector<4x8x1xf32> to vector<4x8x100xf32>
    %33 = arith.subf %17, %32 : vector<4x8x100xf32>
    %34 = vector.broadcast %31 : vector<4x8x1xf32> to vector<4x8x100xf32>
    %35 = arith.mulf %33, %34 : vector<4x8x100xf32>
    %36 = vector.broadcast %2 : vector<4x1x100xf32> to vector<4x8x100xf32>
    %37 = arith.mulf %35, %36 : vector<4x8x100xf32>
    %38 = vector.broadcast %3 : vector<4x1x100xf32> to vector<4x8x100xf32>
    %39 = arith.addf %37, %38 : vector<4x8x100xf32>
    %c0_15 = arith.constant 0 : index
    %c0_16 = arith.constant 0 : index
    %c0_17 = arith.constant 0 : index
    %40 = vector.load %arg3[%c0_15, %c0_16, %c0_17] : memref<4x100x100xf32, #tpu.memory_space<vmem>>, vector<4x100x100xf32>
    "tpu.trace_start"() <{level = 10 : i32, message = "ebh,eho->ebo"}> : () -> ()
    %cst_18 = arith.constant dense<0.000000e+00> : vector<4x8x100xf32>
    %41 = tpu.matmul %39, %40, %cst_18 {dimension_numbers = #tpu.dot_dimension_numbers<[2], [1], [1], [2], [0, 0, 0, 1, 1, 2], [0], [0]>} : vector<4x8x100xf32>, vector<4x100x100xf32>, vector<4x8x100xf32> -> vector<4x8x100xf32>
    "tpu.trace_stop"() : () -> ()
    %42 = vector.broadcast %4 : vector<4x1x100xf32> to vector<4x8x100xf32>
    %43 = arith.addf %41, %42 : vector<4x8x100xf32>
    %cst_19 = arith.constant 0.000000e+00 : f32
    %44 = vector.broadcast %cst_19 : f32 to vector<4x8x100xf32>
    %45 = arith.cmpf ogt, %43, %44 : vector<4x8x100xf32>
    %cst_20 = arith.constant 0.00999999977 : f32
    %46 = vector.broadcast %cst_20 : f32 to vector<4x8x100xf32>
    %47 = arith.mulf %46, %43 : vector<4x8x100xf32>
    %48 = arith.select %45, %43, %47 : vector<4x8x100xi1>, vector<4x8x100xf32>
    %cst_21 = arith.constant dense<0.000000e+00> : vector<4x8xf32>
    %49 = vector.multi_reduction <add>, %48, %cst_21 [2] : vector<4x8x100xf32> to vector<4x8xf32>
    %50 = vector.shape_cast %49 : vector<4x8xf32> to vector<4x8x1xf32>
    %cst_22 = arith.constant 1.000000e+02 : f32
    %51 = vector.broadcast %cst_22 : f32 to vector<4x8x1xf32>
    %52 = arith.divf %50, %51 : vector<4x8x1xf32>
    %53 = arith.mulf %48, %48 : vector<4x8x100xf32>
    %cst_23 = arith.constant dense<0.000000e+00> : vector<4x8xf32>
    %54 = vector.multi_reduction <add>, %53, %cst_23 [2] : vector<4x8x100xf32> to vector<4x8xf32>
    %55 = vector.shape_cast %54 : vector<4x8xf32> to vector<4x8x1xf32>
    %cst_24 = arith.constant 1.000000e+02 : f32
    %56 = vector.broadcast %cst_24 : f32 to vector<4x8x1xf32>
    %57 = arith.divf %55, %56 : vector<4x8x1xf32>
    %58 = arith.mulf %52, %52 : vector<4x8x1xf32>
    %59 = arith.subf %57, %58 : vector<4x8x1xf32>
    %cst_25 = arith.constant 9.99999974E-6 : f32
    %60 = vector.broadcast %cst_25 : f32 to vector<4x8x1xf32>
    %61 = arith.addf %59, %60 : vector<4x8x1xf32>
    %62 = math.rsqrt %61 : vector<4x8x1xf32>
    %63 = vector.broadcast %52 : vector<4x8x1xf32> to vector<4x8x100xf32>
    %64 = arith.subf %48, %63 : vector<4x8x100xf32>
    %65 = vector.broadcast %62 : vector<4x8x1xf32> to vector<4x8x100xf32>
    %66 = arith.mulf %64, %65 : vector<4x8x100xf32>
    %67 = vector.broadcast %5 : vector<4x1x100xf32> to vector<4x8x100xf32>
    %68 = arith.mulf %66, %67 : vector<4x8x100xf32>
    %69 = vector.broadcast %6 : vector<4x1x100xf32> to vector<4x8x100xf32>
    %70 = arith.addf %68, %69 : vector<4x8x100xf32>
    %c0_26 = arith.constant 0 : index
    %c0_27 = arith.constant 0 : index
    %c0_28 = arith.constant 0 : index
    %71 = vector.load %arg4[%c0_26, %c0_27, %c0_28] : memref<4x100x8xf32, #tpu.memory_space<vmem>>, vector<4x100x8xf32>
    "tpu.trace_start"() <{level = 10 : i32, message = "ebh,eho->ebo"}> : () -> ()
    %cst_29 = arith.constant dense<0.000000e+00> : vector<4x8x8xf32>
    %72 = tpu.matmul %70, %71, %cst_29 {dimension_numbers = #tpu.dot_dimension_numbers<[2], [1], [1], [2], [0, 0, 0, 1, 1, 2], [0], [0]>} : vector<4x8x100xf32>, vector<4x100x8xf32>, vector<4x8x8xf32> -> vector<4x8x8xf32>
    "tpu.trace_stop"() : () -> ()
    %73 = vector.broadcast %7 : vector<4x1x8xf32> to vector<4x8x8xf32>
    %74 = arith.addf %72, %73 : vector<4x8x8xf32>
    %c0_30 = arith.constant 0 : index
    %c0_31 = arith.constant 0 : index
    %c0_32 = arith.constant 0 : index
    %75 = vector.load %arg6[%c0_30, %c0_31, %c0_32] : memref<4x8x8xf32, #tpu.memory_space<vmem>>, vector<4x8x8xf32>
    tpu.vector_store %arg6[%c0_30, %c0_31, %c0_32], %74 {strides = array<i32>} : memref<4x8x8xf32, #tpu.memory_space<vmem>>, vector<4x8x8xf32>,
    return
  }
  func.func @transform_0(%arg0: i32) -> (i32, i32, i32) {
    %c0_i32 = arith.constant 0 : i32
    %c0_i32_0 = arith.constant 0 : i32
    %c0_i32_1 = arith.constant 0 : i32
    return %arg0, %c0_i32, %c0_i32_0 : i32, i32, i32
  }
  func.func @transform_1(%arg0: i32) -> (i32, i32, i32) {
    %c0_i32 = arith.constant 0 : i32
    %c0_i32_0 = arith.constant 0 : i32
    %c0_i32_1 = arith.constant 0 : i32
    return %arg0, %c0_i32, %c0_i32_0 : i32, i32, i32
  }
  func.func @transform_2(%arg0: i32) -> (i32, i32, i32) {
    %c0_i32 = arith.constant 0 : i32
    %c0_i32_0 = arith.constant 0 : i32
    %c0_i32_1 = arith.constant 0 : i32
    return %arg0, %c0_i32, %c0_i32_0 : i32, i32, i32
  }
  func.func @transform_3(%arg0: i32) -> (i32, i32, i32) {
    %c0_i32 = arith.constant 0 : i32
    %c0_i32_0 = arith.constant 0 : i32
    %c0_i32_1 = arith.constant 0 : i32
    return %arg0, %c0_i32, %c0_i32_0 : i32, i32, i32
  }
  func.func @transform_4(%arg0: i32) -> (i32, i32, i32) {
    %c0_i32 = arith.constant 0 : i32
    %c0_i32_0 = arith.constant 0 : i32
    %c0_i32_1 = arith.constant 0 : i32
    return %arg0, %c0_i32, %c0_i32_0 : i32, i32, i32
  }
  func.func @transform_5(%arg0: i32) -> (i32, i32, i32) {
    %c0_i32 = arith.constant 0 : i32
    %c0_i32_0 = arith.constant 0 : i32
    %c0_i32_1 = arith.constant 0 : i32
    return %arg0, %c0_i32, %c0_i32_0 : i32, i32, i32
  }
}

</mosaic_0001>

<llo_original>
// kernel: rt_nw_forward.1
$region0: #{rt_nw_forward.1}
  #allocation0 [shape = 'u32[]', space=smem, size = 0x4, offset = 0x4, fixed_abs, tag = 'smem constant byte address 0x4 - core index']
  #allocation1 [shape = 'u32[144,128]{1,0:T(1,128)}', space=vmem, size = 0x12000, scoped, tag = 'internal scratch']
  %s0 = inlined_call_operand.vmem [shape: f32[4,8,16], index: 0, kind: input, shape index: {}]
  %s1 = inlined_call_operand.vmem [shape: f32[4,16,100], index: 1, kind: input, shape index: {}]
  %s2 = inlined_call_operand.vmem [shape: f32[4,100,100], index: 2, kind: input, shape index: {}]
  %s3 = inlined_call_operand.vmem [shape: f32[4,100,8], index: 3, kind: input, shape index: {}]
  %s4 = inlined_call_operand.vmem [shape: f32[4,8,128], index: 4, kind: input, shape index: {}]
  %s5 = inlined_call_operand.hbm [shape: f32[4,8,8], index: 5, kind: output, shape index: {}]
  %s6 = sld [smem:[#allocation0]]
  $region30: #{rt_nw_forward.1} parent=0
    _
  %s8 = ssub.s32 1, %s6
  %s9 = scalar_select 0, %s8, %s6
  $region1: #{rt_nw_forward.1} parent=0
    #allocation2 [shape = 'u8[16384]{0}', space=vmem, size = 0x4000, scoped, tag = 'output window, operand 0, single buffered']
    #allocation3 [shape = 's32[1]{0}', space=sflag, size = 0x4, scoped, tag = 'scoped memory for rt_nw_forward.1']
    %10 = vsyncpa [#allocation3], 0
    // Predicated region
    $region2: #{rt_nw_forward.1} parent=1 // pred_check
      _
    $region3: #{rt_nw_forward.1} parent=1 // pred_check_branch
      %12 = sbr.rel (0) target = $region5
    $region4: #{rt_nw_forward.1} parent=1 // pred_region
      _
    $region5: #{rt_nw_forward.1} parent=1 // pred_fallthru
      _
    // Predicated region
    $region6: #{rt_nw_forward.1} parent=1 // pred_check
      _
    $region7: #{rt_nw_forward.1} parent=1 // pred_check_branch
      %14 = sbr.rel (0) target = $region9
    $region8: #{rt_nw_forward.1} parent=1 // pred_region
      _
    $region9: #{rt_nw_forward.1} parent=1 // pred_fallthru
      _
    // Predicated region
    $region10: #{rt_nw_forward.1} parent=1 // pred_check
      _
    $region11: #{rt_nw_forward.1} parent=1 // pred_check_branch
      %16 = sbr.rel (0) target = $region13
    $region12: #{rt_nw_forward.1} parent=1 // pred_region
      _
    $region13: #{rt_nw_forward.1} parent=1 // pred_fallthru
      _
    // Predicated region
    $region14: #{rt_nw_forward.1} parent=1 // pred_check
      _
    $region15: #{rt_nw_forward.1} parent=1 // pred_check_branch
      %18 = sbr.rel (0) target = $region17
    $region16: #{rt_nw_forward.1} parent=1 // pred_region
      _
    $region17: #{rt_nw_forward.1} parent=1 // pred_fallthru
      _
    // Predicated region
    $region18: #{rt_nw_forward.1} parent=1 // pred_check
      _
    $region19: #{rt_nw_forward.1} parent=1 // pred_check_branch
      %20 = sbr.rel (0) target = $region21
    $region20: #{rt_nw_forward.1} parent=1 // pred_region
      _
    $region21: #{rt_nw_forward.1} parent=1 // pred_fallthru
      _
    %v21 = vld [vmem:[%s4] sm:$0xff]
    %v22 = vld [vmem:[%s4 + $0x8] sm:$0xff]
    %v23 = vld [vmem:[%s4 + $0x10] sm:$0xff]
    %v24 = vld [vmem:[%s4 + $0x18] sm:$0xff]
    %v25 = vld [vmem:[%s0] sm:$0xff]
    %v26 = vld [vmem:[%s0 + $0x8] sm:$0xff]
    %v27 = vld [vmem:[%s0 + $0x10] sm:$0xff]
    %v28 = vld [vmem:[%s0 + $0x18] sm:$0xff]
    %v29 = vld [vmem:[%s1] sm:$0xff]
    %v30 = vld [vmem:[%s1 + $0x8] sm:$0xff]
    %v31 = vld [vmem:[%s1 + $0x10] sm:$0xff]
    %v32 = vld [vmem:[%s1 + $0x18] sm:$0xff]
    %v33 = vld [vmem:[%s1 + $0x20] sm:$0xff]
    %v34 = vld [vmem:[%s1 + $0x28] sm:$0xff]
    %v35 = vld [vmem:[%s1 + $0x30] sm:$0xff]
    %v36 = vld [vmem:[%s1 + $0x38] sm:$0xff]
    %v37 = vlaneseq
    %v38 = vshrl.u32 %v37, 7
    %v39 = vsub.s32 0, %v38
    %v40 = vrot.slane %v21, %v39
    %v41 = vlaneseq
    %v42 = vshrl.u32 %v41, 7
    %v43 = vsub.s32 0, %v42
    %v44 = vrot.slane %v22, %v43
    %v45 = vlaneseq
    %v46 = vshrl.u32 %v45, 7
    %v47 = vsub.s32 0, %v46
    %v48 = vrot.slane %v23, %v47
    %v49 = vlaneseq
    %v50 = vshrl.u32 %v49, 7
    %v51 = vsub.s32 0, %v50
    %v52 = vrot.slane %v24, %v51
    %vm53 = vcmask 130048
    %v55 = vsel %vm53, %v25, 0
    %57 = vmatprep.subr.mxu0 0.0
    %58 = vmatpush1.msra.mxu0 %v29
    %59 = vmatprep.subr.mxu0 0.0
    %60 = vmatpush1.msra.mxu0 %v30
    %61 = vmatprep.subr.mxu0 0.0
    %62 = vmatpush1.msra.mxu0 0.0
    %63 = vmatprep.subr.mxu0 0.0
    %64 = vmatpush1.msra.mxu0 0.0
    %65 = vmatprep.subr.mxu0 0.0
    %66 = vmatpush1.msra.mxu0 0.0
    %67 = vmatprep.subr.mxu0 0.0
    %68 = vmatpush1.msra.mxu0 0.0
    %69 = vmatprep.subr.mxu0 0.0
    %70 = vmatpush1.msra.mxu0 0.0
    %71 = vmatprep.subr.mxu0 0.0
    %72 = vmatpush1.msra.mxu0 0.0
    %73 = vmatprep.subr.mxu0 0.0
    %74 = vmatpush1.msra.mxu0 0.0
    %75 = vmatprep.subr.mxu0 0.0
    %76 = vmatpush1.msra.mxu0 0.0
    %77 = vmatprep.subr.mxu0 0.0
    %78 = vmatpush1.msra.mxu0 0.0
    %79 = vmatprep.subr.mxu0 0.0
    %80 = vmatpush1.msra.mxu0 0.0
    %81 = vmatprep.subr.mxu0 0.0
    %82 = vmatpush1.msra.mxu0 0.0
    %83 = vmatprep.subr.mxu0 0.0
    %84 = vmatpush1.msra.mxu0 0.0
    %85 = vmatprep.subr.mxu0 0.0
    %86 = vmatpush1.msra.mxu0 0.0
    %87 = vmatprep.subr.mxu0 0.0
    %88 = vmatpush1.msra.mxu0 0.0
    %89 = vmatprep.subr.mxu0 0.0
    %90 = vmatpush1.msra.mxu0 0.0
    %91 = vmatprep.subr.mxu0 0.0
    %92 = vmatpush1.msra.mxu0 0.0
    %93 = vmatprep.subr.mxu0 0.0
    %94 = vmatpush1.msra.mxu0 0.0
    %95 = vmatprep.subr.mxu0 0.0
    %96 = vmatpush1.msra.mxu0 0.0
    %97 = vmatprep.subr.mxu0 0.0
    %98 = vmatpush1.msra.mxu0 0.0
    %99 = vmatprep.subr.mxu0 0.0
    %100 = vmatpush1.msra.mxu0 0.0
    %101 = vmatprep.subr.mxu0 0.0
    %102 = vmatpush1.msra.mxu0 0.0
    %103 = vmatprep.subr.mxu0 0.0
    %104 = vmatpush1.msra.mxu0 0.0
    %105 = vmatprep.subr.mxu0 0.0
    %106 = vmatpush1.msra.mxu0 0.0
    %107 = vmatprep.subr.mxu0 0.0
    %108 = vmatpush1.msra.mxu0 0.0
    %109 = vmatprep.subr.mxu0 0.0
    %110 = vmatpush1.msra.mxu0 0.0
    %111 = vmatprep.subr.mxu0 0.0
    %112 = vmatpush1.msra.mxu0 0.0
    %113 = vmatprep.subr.mxu0 0.0
    %114 = vmatpush1.msra.mxu0 0.0
    %115 = vmatprep.subr.mxu0 0.0
    %116 = vmatpush1.msra.mxu0 0.0
    %117 = vmatprep.subr.mxu0 0.0
    %118 = vmatpush1.msra.mxu0 0.0
    %119 = vmatprep.subr.mxu0 0.0
    %120 = vmatpush1.msra.mxu0 0.0
    %121 = vmatprep.mubr.f32.mxu0 0.0
    %122 = vmatmul.mubr.f32.gmra.mrb[0].mxu0 %v55
    %v123 = vpop.f32.mrb[0].mxu0
    %v124 = vadd.f32 %v40, %v123
    %v125 = vpop.f32.mrb[0].mxu0
    %126 = vdwg.mxu0
    %v128 = vsel %vm53, %v26, 0
    %130 = vmatprep.subr.mxu0 0.0
    %131 = vmatpush1.msra.mxu0 %v31
    %132 = vmatprep.subr.mxu0 0.0
    %133 = vmatpush1.msra.mxu0 %v32
    %134 = vmatprep.subr.mxu0 0.0
    %135 = vmatpush1.msra.mxu0 0.0
    %136 = vmatprep.subr.mxu0 0.0
    %137 = vmatpush1.msra.mxu0 0.0
    %138 = vmatprep.subr.mxu0 0.0
    %139 = vmatpush1.msra.mxu0 0.0
    %140 = vmatprep.subr.mxu0 0.0
    %141 = vmatpush1.msra.mxu0 0.0
    %142 = vmatprep.subr.mxu0 0.0
    %143 = vmatpush1.msra.mxu0 0.0
    %144 = vmatprep.subr.mxu0 0.0
    %145 = vmatpush1.msra.mxu0 0.0
    %146 = vmatprep.subr.mxu0 0.0
    %147 = vmatpush1.msra.mxu0 0.0
    %148 = vmatprep.subr.mxu0 0.0
    %149 = vmatpush1.msra.mxu0 0.0
    %150 = vmatprep.subr.mxu0 0.0
    %151 = vmatpush1.msra.mxu0 0.0
    %152 = vmatprep.subr.mxu0 0.0
    %153 = vmatpush1.msra.mxu0 0.0
    %154 = vmatprep.subr.mxu0 0.0
    %155 = vmatpush1.msra.mxu0 0.0
    %156 = vmatprep.subr.mxu0 0.0
    %157 = vmatpush1.msra.mxu0 0.0
    %158 = vmatprep.subr.mxu0 0.0
    %159 = vmatpush1.msra.mxu0 0.0
    %160 = vmatprep.subr.mxu0 0.0
    %161 = vmatpush1.msra.mxu0 0.0
    %162 = vmatprep.subr.mxu0 0.0
    %163 = vmatpush1.msra.mxu0 0.0
    %164 = vmatprep.subr.mxu0 0.0
    %165 = vmatpush1.msra.mxu0 0.0
    %166 = vmatprep.subr.mxu0 0.0
    %167 = vmatpush1.msra.mxu0 0.0
    %168 = vmatprep.subr.mxu0 0.0
    %169 = vmatpush1.msra.mxu0 0.0
    %170 = vmatprep.subr.mxu0 0.0
    %171 = vmatpush1.msra.mxu0 0.0
    %172 = vmatprep.subr.mxu0 0.0
    %173 = vmatpush1.msra.mxu0 0.0
    %174 = vmatprep.subr.mxu0 0.0
    %175 = vmatpush1.msra.mxu0 0.0
    %176 = vmatprep.subr.mxu0 0.0
    %177 = vmatpush1.msra.mxu0 0.0
    %178 = vmatprep.subr.mxu0 0.0
    %179 = vmatpush1.msra.mxu0 0.0
    %180 = vmatprep.subr.mxu0 0.0
    %181 = vmatpush1.msra.mxu0 0.0
    %182 = vmatprep.subr.mxu0 0.0
    %183 = vmatpush1.msra.mxu0 0.0
    %184 = vmatprep.subr.mxu0 0.0
    %185 = vmatpush1.msra.mxu0 0.0
    %186 = vmatprep.subr.mxu0 0.0
    %187 = vmatpush1.msra.mxu0 0.0
    %188 = vmatprep.subr.mxu0 0.0
    %189 = vmatpush1.msra.mxu0 0.0
    %190 = vmatprep.subr.mxu0 0.0
    %191 = vmatpush1.msra.mxu0 0.0
    %192 = vmatprep.subr.mxu0 0.0
    %193 = vmatpush1.msra.mxu0 0.0
    %194 = vmatprep.mubr.f32.mxu0 0.0
    %195 = vmatmul.mubr.f32.gmra.mrb[0].mxu0 %v128
    %v196 = vpop.f32.mrb[0].mxu0
    %v197 = vadd.f32 %v44, %v196
    %v198 = vpop.f32.mrb[0].mxu0
    %199 = vdwg.mxu0
    %v201 = vsel %vm53, %v27, 0
    %203 = vmatprep.subr.mxu0 0.0
    %204 = vmatpush1.msra.mxu0 %v33
    %205 = vmatprep.subr.mxu0 0.0
    %206 = vmatpush1.msra.mxu0 %v34
    %207 = vmatprep.subr.mxu0 0.0
    %208 = vmatpush1.msra.mxu0 0.0
    %209 = vmatprep.subr.mxu0 0.0
    %210 = vmatpush1.msra.mxu0 0.0
    %211 = vmatprep.subr.mxu0 0.0
    %212 = vmatpush1.msra.mxu0 0.0
    %213 = vmatprep.subr.mxu0 0.0
    %214 = vmatpush1.msra.mxu0 0.0
    %215 = vmatprep.subr.mxu0 0.0
    %216 = vmatpush1.msra.mxu0 0.0
    %217 = vmatprep.subr.mxu0 0.0
    %218 = vmatpush1.msra.mxu0 0.0
    %219 = vmatprep.subr.mxu0 0.0
    %220 = vmatpush1.msra.mxu0 0.0
    %221 = vmatprep.subr.mxu0 0.0
    %222 = vmatpush1.msra.mxu0 0.0
    %223 = vmatprep.subr.mxu0 0.0
    %224 = vmatpush1.msra.mxu0 0.0
    %225 = vmatprep.subr.mxu0 0.0
    %226 = vmatpush1.msra.mxu0 0.0
    %227 = vmatprep.subr.mxu0 0.0
    %228 = vmatpush1.msra.mxu0 0.0
    %229 = vmatprep.subr.mxu0 0.0
    %230 = vmatpush1.msra.mxu0 0.0
    %231 = vmatprep.subr.mxu0 0.0
    %232 = vmatpush1.msra.mxu0 0.0
    %233 = vmatprep.subr.mxu0 0.0
    %234 = vmatpush1.msra.mxu0 0.0
    %235 = vmatprep.subr.mxu0 0.0
    %236 = vmatpush1.msra.mxu0 0.0
    %237 = vmatprep.subr.mxu0 0.0
    %238 = vmatpush1.msra.mxu0 0.0
    %239 = vmatprep.subr.mxu0 0.0
    %240 = vmatpush1.msra.mxu0 0.0
    %241 = vmatprep.subr.mxu0 0.0
    %242 = vmatpush1.msra.mxu0 0.0
    %243 = vmatprep.subr.mxu0 0.0
    %244 = vmatpush1.msra.mxu0 0.0
    %245 = vmatprep.subr.mxu0 0.0
    %246 = vmatpush1.msra.mxu0 0.0
    %247 = vmatprep.subr.mxu0 0.0
    %248 = vmatpush1.msra.mxu0 0.0
    %249 = vmatprep.subr.mxu0 0.0
    %250 = vmatpush1.msra.mxu0 0.0
    %251 = vmatprep.subr.mxu0 0.0
    %252 = vmatpush1.msra.mxu0 0.0
    %253 = vmatprep.subr.mxu0 0.0
    %254 = vmatpush1.msra.mxu0 0.0
    %255 = vmatprep.subr.mxu0 0.0
    %256 = vmatpush1.msra.mxu0 0.0
    %257 = vmatprep.subr.mxu0 0.0
    %258 = vmatpush1.msra.mxu0 0.0
    %259 = vmatprep.subr.mxu0 0.0
    %260 = vmatpush1.msra.mxu0 0.0
    %261 = vmatprep.subr.mxu0 0.0
    %262 = vmatpush1.msra.mxu0 0.0
    %263 = vmatprep.subr.mxu0 0.0
    %264 = vmatpush1.msra.mxu0 0.0
    %265 = vmatprep.subr.mxu0 0.0
    %266 = vmatpush1.msra.mxu0 0.0
    %267 = vmatprep.mubr.f32.mxu0 0.0
    %268 = vmatmul.mubr.f32.gmra.mrb[0].mxu0 %v201
    %v269 = vpop.f32.mrb[0].mxu0
    %v270 = vadd.f32 %v48, %v269
    %v271 = vpop.f32.mrb[0].mxu0
    %272 = vdwg.mxu0
    %v274 = vsel %vm53, %v28, 0
    %276 = vmatprep.subr.mxu0 0.0
    %277 = vmatpush1.msra.mxu0 %v35
    %278 = vmatprep.subr.mxu0 0.0
    %279 = vmatpush1.msra.mxu0 %v36
    %280 = vmatprep.subr.mxu0 0.0
    %281 = vmatpush1.msra.mxu0 0.0
    %282 = vmatprep.subr.mxu0 0.0
    %283 = vmatpush1.msra.mxu0 0.0
    %284 = vmatprep.subr.mxu0 0.0
    %285 = vmatpush1.msra.mxu0 0.0
    %286 = vmatprep.subr.mxu0 0.0
    %287 = vmatpush1.msra.mxu0 0.0
    %288 = vmatprep.subr.mxu0 0.0
    %289 = vmatpush1.msra.mxu0 0.0
    %290 = vmatprep.subr.mxu0 0.0
    %291 = vmatpush1.msra.mxu0 0.0
    %292 = vmatprep.subr.mxu0 0.0
    %293 = vmatpush1.msra.mxu0 0.0
    %294 = vmatprep.subr.mxu0 0.0
    %295 = vmatpush1.msra.mxu0 0.0
    %296 = vmatprep.subr.mxu0 0.0
    %297 = vmatpush1.msra.mxu0 0.0
    %298 = vmatprep.subr.mxu0 0.0
    %299 = vmatpush1.msra.mxu0 0.0
    %300 = vmatprep.subr.mxu0 0.0
    %301 = vmatpush1.msra.mxu0 0.0
    %302 = vmatprep.subr.mxu0 0.0
    %303 = vmatpush1.msra.mxu0 0.0
    %304 = vmatprep.subr.mxu0 0.0
    %305 = vmatpush1.msra.mxu0 0.0
    %306 = vmatprep.subr.mxu0 0.0
    %307 = vmatpush1.msra.mxu0 0.0
    %308 = vmatprep.subr.mxu0 0.0
    %309 = vmatpush1.msra.mxu0 0.0
    %310 = vmatprep.subr.mxu0 0.0
    %311 = vmatpush1.msra.mxu0 0.0
    %312 = vmatprep.subr.mxu0 0.0
    %313 = vmatpush1.msra.mxu0 0.0
    %314 = vmatprep.subr.mxu0 0.0
    %315 = vmatpush1.msra.mxu0 0.0
    %316 = vmatprep.subr.mxu0 0.0
    %317 = vmatpush1.msra.mxu0 0.0
    %318 = vmatprep.subr.mxu0 0.0
    %319 = vmatpush1.msra.mxu0 0.0
    %320 = vmatprep.subr.mxu0 0.0
    %321 = vmatpush1.msra.mxu0 0.0
    %322 = vmatprep.subr.mxu0 0.0
    %323 = vmatpush1.msra.mxu0 0.0
    %324 = vmatprep.subr.mxu0 0.0
    %325 = vmatpush1.msra.mxu0 0.0
    %326 = vmatprep.subr.mxu0 0.0
    %327 = vmatpush1.msra.mxu0 0.0
    %328 = vmatprep.subr.mxu0 0.0
    %329 = vmatpush1.msra.mxu0 0.0
    %330 = vmatprep.subr.mxu0 0.0
    %331 = vmatpush1.msra.mxu0 0.0
    %332 = vmatprep.subr.mxu0 0.0
    %333 = vmatpush1.msra.mxu0 0.0
    %334 = vmatprep.subr.mxu0 0.0
    %335 = vmatpush1.msra.mxu0 0.0
    %336 = vmatprep.subr.mxu0 0.0
    %337 = vmatpush1.msra.mxu0 0.0
    %338 = vmatprep.subr.mxu0 0.0
    %339 = vmatpush1.msra.mxu0 0.0
    %340 = vmatprep.mubr.f32.mxu0 0.0
    %341 = vmatmul.mubr.f32.gmra.mrb[0].mxu0 %v274
    %v342 = vpop.f32.mrb[0].mxu0
    %v343 = vadd.f32 %v52, %v342
    %v344 = vpop.f32.mrb[0].mxu0
    %345 = vdwg.mxu0
    %vm346 = vcmp.gt.f32.partialorder %v124, 0.0
    %vm347 = vcmp.gt.f32.partialorder %v197, 0.0
    %vm348 = vcmp.gt.f32.partialorder %v270, 0.0
    %vm349 = vcmp.gt.f32.partialorder %v343, 0.0
    %v350 = vmul.f32 %v124, 0.01
    %v351 = vmul.f32 %v197, 0.01
    %v352 = vmul.f32 %v270, 0.01
    %v353 = vmul.f32 %v343, 0.01
    %v354 = vsel %vm346, %v124, %v350
    %v355 = vsel %vm347, %v197, %v351
    %v356 = vsel %vm348, %v270, %v352
    %v357 = vsel %vm349, %v343, %v353
    %vm358 = vcmask 818176
    %v359 = vsel %vm358, %v354, 0.0
    %360 = vadd.xlane.f32.xlu0 %v359
    %v361 = vpop.xlane.xlu0 %360
    %v362 = vsel %vm358, %v355, 0.0
    %363 = vadd.xlane.f32.xlu0 %v362
    %v364 = vpop.xlane.xlu0 %363
    %v365 = vsel %vm358, %v356, 0.0
    %366 = vadd.xlane.f32.xlu0 %v365
    %v367 = vpop.xlane.xlu0 %366
    %v368 = vsel %vm358, %v357, 0.0
    %369 = vadd.xlane.f32.xlu0 %v368
    %v370 = vpop.xlane.xlu0 %369
    %v371 = vrcp.pop 100.0
    %v372 = vmul.f32 %v361, %v371
    %v373 = vmul.f32 %v364, %v371
    %v374 = vmul.f32 %v367, %v371
    %v375 = vmul.f32 %v370, %v371
    %v376 = vmul.f32 %v354, %v354
    %v377 = vmul.f32 %v355, %v355
    %v378 = vmul.f32 %v356, %v356
    %v379 = vmul.f32 %v357, %v357
    %v380 = vsel %vm358, %v376, 0.0
    %381 = vadd.xlane.f32.xlu0 %v380
    %v382 = vpop.xlane.xlu0 %381
    %v383 = vsel %vm358, %v377, 0.0
    %384 = vadd.xlane.f32.xlu0 %v383
    %v385 = vpop.xlane.xlu0 %384
    %v386 = vsel %vm358, %v378, 0.0
    %387 = vadd.xlane.f32.xlu0 %v386
    %v388 = vpop.xlane.xlu0 %387
    %v389 = vsel %vm358, %v379, 0.0
    %390 = vadd.xlane.f32.xlu0 %v389
    %v391 = vpop.xlane.xlu0 %390
    %v392 = vmul.f32 %v382, %v371
    %v393 = vmul.f32 %v385, %v371
    %v394 = vmul.f32 %v388, %v371
    %v395 = vmul.f32 %v391, %v371
    %v396 = vmul.f32 %v372, %v372
    %v397 = vmul.f32 %v373, %v373
    %v398 = vmul.f32 %v374, %v374
    %v399 = vmul.f32 %v375, %v375
    %v400 = vsub.f32 %v392, %v396
    %v401 = vsub.f32 %v393, %v397
    %v402 = vsub.f32 %v394, %v398
    %v403 = vsub.f32 %v395, %v399
    %v404 = vadd.f32 %v400, 1e-05
    %v405 = vadd.f32 %v401, 1e-05
    %v406 = vadd.f32 %v402, 1e-05
    %v407 = vadd.f32 %v403, 1e-05
    %v408 = vrsqrt.pop %v404
    %v409 = vrsqrt.pop %v405
    %v410 = vrsqrt.pop %v406
    %v411 = vrsqrt.pop %v407
    %v412 = vsub.f32 %v354, %v372
    %v413 = vsub.f32 %v355, %v373
    %v414 = vsub.f32 %v356, %v374
    %v415 = vsub.f32 %v357, %v375
    %v416 = vmul.f32 %v412, %v408
    %v417 = vmul.f32 %v413, %v409
    %v418 = vmul.f32 %v414, %v410
    %v419 = vmul.f32 %v415, %v411
    %v420 = vlaneseq
    %v421 = vshrl.u32 %v420, 7
    %v422 = vsub.s32 1, %v421
    %v423 = vrot.slane %v21, %v422
    %v424 = vlaneseq
    %v425 = vshrl.u32 %v424, 7
    %v426 = vsub.s32 1, %v425
    %v427 = vrot.slane %v22, %v426
    %v428 = vlaneseq
    %v429 = vshrl.u32 %v428, 7
    %v430 = vsub.s32 1, %v429
    %v431 = vrot.slane %v23, %v430
    %v432 = vlaneseq
    %v433 = vshrl.u32 %v432, 7
    %v434 = vsub.s32 1, %v433
    %v435 = vrot.slane %v24, %v434
    %v436 = vmul.f32 %v416, %v423
    %v437 = vmul.f32 %v417, %v427
    %v438 = vmul.f32 %v418, %v431
    %v439 = vmul.f32 %v419, %v435
    %v440 = vlaneseq
    %v441 = vshrl.u32 %v440, 7
    %v442 = vsub.s32 2, %v441
    %v443 = vrot.slane %v21, %v442
    %v444 = vlaneseq
    %v445 = vshrl.u32 %v444, 7
    %v446 = vsub.s32 2, %v445
    %v447 = vrot.slane %v22, %v446
    %v448 = vlaneseq
    %v449 = vshrl.u32 %v448, 7
    %v450 = vsub.s32 2, %v449
    %v451 = vrot.slane %v23, %v450
    %v452 = vlaneseq
    %v453 = vshrl.u32 %v452, 7
    %v454 = vsub.s32 2, %v453
    %v455 = vrot.slane %v24, %v454
    %v456 = vadd.f32 %v436, %v443
    %v457 = vadd.f32 %v437, %v447
    %v458 = vadd.f32 %v438, %v451
    %v459 = vadd.f32 %v439, %v455
    %v460 = vld [vmem:[%s2] sm:$0xff]
    %v461 = vld [vmem:[%s2 + $0x8] sm:$0xff]
    %v462 = vld [vmem:[%s2 + $0x10] sm:$0xff]
    %v463 = vld [vmem:[%s2 + $0x18] sm:$0xff]
    %v464 = vld [vmem:[%s2 + $0x20] sm:$0xff]
    %v465 = vld [vmem:[%s2 + $0x28] sm:$0xff]
    %v466 = vld [vmem:[%s2 + $0x30] sm:$0xff]
    %v467 = vld [vmem:[%s2 + $0x38] sm:$0xff]
    %v468 = vld [vmem:[%s2 + $0x40] sm:$0xff]
    %v469 = vld [vmem:[%s2 + $0x48] sm:$0xff]
    %v470 = vld [vmem:[%s2 + $0x50] sm:$0xff]
    %v471 = vld [vmem:[%s2 + $0x58] sm:$0xff]
    %v472 = vld [vmem:[%s2 + $0x60] sm:$0xf]
    %v473 = vld [vmem:[%s2 + $0x68] sm:$0xff]
    %v474 = vld [vmem:[%s2 + $0x70] sm:$0xff]
    %v475 = vld [vmem:[%s2 + $0x78] sm:$0xff]
    %v476 = vld [vmem:[%s2 + $0x80] sm:$0xff]
    %v477 = vld [vmem:[%s2 + $0x88] sm:$0xff]
    %v478 = vld [vmem:[%s2 + $0x90] sm:$0xff]
    %v479 = vld [vmem:[%s2 + $0x98] sm:$0xff]
    %v480 = vld [vmem:[%s2 + $0xa0] sm:$0xff]
    %v481 = vld [vmem:[%s2 + $0xa8] sm:$0xff]
    %v482 = vld [vmem:[%s2 + $0xb0] sm:$0xff]
    %v483 = vld [vmem:[%s2 + $0xb8] sm:$0xff]
    %v484 = vld [vmem:[%s2 + $0xc0] sm:$0xff]
    %v485 = vld [vmem:[%s2 + $0xc8] sm:$0xf]
    %v486 = vld [vmem:[%s2 + $0xd0] sm:$0xff]
    %v487 = vld [vmem:[%s2 + $0xd8] sm:$0xff]
    %v488 = vld [vmem:[%s2 + $0xe0] sm:$0xff]
    %v489 = vld [vmem:[%s2 + $0xe8] sm:$0xff]
    %v490 = vld [vmem:[%s2 + $0xf0] sm:$0xff]
    %v491 = vld [vmem:[%s2 + $0xf8] sm:$0xff]
    %v492 = vld [vmem:[%s2 + $0x100] sm:$0xff]
    %v493 = vld [vmem:[%s2 + $0x108] sm:$0xff]
    %v494 = vld [vmem:[%s2 + $0x110] sm:$0xff]
    %v495 = vld [vmem:[%s2 + $0x118] sm:$0xff]
    %v496 = vld [vmem:[%s2 + $0x120] sm:$0xff]
    %v497 = vld [vmem:[%s2 + $0x128] sm:$0xff]
    %v498 = vld [vmem:[%s2 + $0x130] sm:$0xf]
    %v499 = vld [vmem:[%s2 + $0x138] sm:$0xff]
    %v500 = vld [vmem:[%s2 + $0x140] sm:$0xff]
    %v501 = vld [vmem:[%s2 + $0x148] sm:$0xff]
    %v502 = vld [vmem:[%s2 + $0x150] sm:$0xff]
    %v503 = vld [vmem:[%s2 + $0x158] sm:$0xff]
    %v504 = vld [vmem:[%s2 + $0x160] sm:$0xff]
    %v505 = vld [vmem:[%s2 + $0x168] sm:$0xff]
    %v506 = vld [vmem:[%s2 + $0x170] sm:$0xff]
    %v507 = vld [vmem:[%s2 + $0x178] sm:$0xff]
    %v508 = vld [vmem:[%s2 + $0x180] sm:$0xff]
    %v509 = vld [vmem:[%s2 + $0x188] sm:$0xff]
    %v510 = vld [vmem:[%s2 + $0x190] sm:$0xff]
    %v511 = vld [vmem:[%s2 + $0x198] sm:$0xf]
    %v512 = vlaneseq
    %v513 = vshrl.u32 %v512, 7
    %v514 = vsub.s32 3, %v513
    %v515 = vrot.slane %v21, %v514
    %v516 = vlaneseq
    %v517 = vshrl.u32 %v516, 7
    %v518 = vsub.s32 3, %v517
    %v519 = vrot.slane %v22, %v518
    %v520 = vlaneseq
    %v521 = vshrl.u32 %v520, 7
    %v522 = vsub.s32 3, %v521
    %v523 = vrot.slane %v23, %v522
    %v524 = vlaneseq
    %v525 = vshrl.u32 %v524, 7
    %v526 = vsub.s32 3, %v525
    %v527 = vrot.slane %v24, %v526
    %v529 = vsel %vm358, %v456, 0
    %vm531 = vcmask 1043456
    %v533 = vsel %vm531, %v472, 0
    %535 = vmatprep.subr.mxu0 0.0
    %536 = vmatpush1.msra.mxu0 %v460
    %537 = vmatprep.subr.mxu0 0.0
    %538 = vmatpush1.msra.mxu0 %v461
    %539 = vmatprep.subr.mxu0 0.0
    %540 = vmatpush1.msra.mxu0 %v462
    %541 = vmatprep.subr.mxu0 0.0
    %542 = vmatpush1.msra.mxu0 %v463
    %543 = vmatprep.subr.mxu0 0.0
    %544 = vmatpush1.msra.mxu0 %v464
    %545 = vmatprep.subr.mxu0 0.0
    %546 = vmatpush1.msra.mxu0 %v465
    %547 = vmatprep.subr.mxu0 0.0
    %548 = vmatpush1.msra.mxu0 %v466
    %549 = vmatprep.subr.mxu0 0.0
    %550 = vmatpush1.msra.mxu0 %v467
    %551 = vmatprep.subr.mxu0 0.0
    %552 = vmatpush1.msra.mxu0 %v468
    %553 = vmatprep.subr.mxu0 0.0
    %554 = vmatpush1.msra.mxu0 %v469
    %555 = vmatprep.subr.mxu0 0.0
    %556 = vmatpush1.msra.mxu0 %v470
    %557 = vmatprep.subr.mxu0 0.0
    %558 = vmatpush1.msra.mxu0 %v471
    %559 = vmatprep.subr.mxu0 0.0
    %560 = vmatpush1.msra.mxu0 %v533
    %561 = vmatprep.subr.mxu0 0.0
    %562 = vmatpush1.msra.mxu0 0.0
    %563 = vmatprep.subr.mxu0 0.0
    %564 = vmatpush1.msra.mxu0 0.0
    %565 = vmatprep.subr.mxu0 0.0
    %566 = vmatpush1.msra.mxu0 0.0
    %567 = vmatprep.subr.mxu0 0.0
    %568 = vmatpush1.msra.mxu0 0.0
    %569 = vmatprep.subr.mxu0 0.0
    %570 = vmatpush1.msra.mxu0 0.0
    %571 = vmatprep.subr.mxu0 0.0
    %572 = vmatpush1.msra.mxu0 0.0
    %573 = vmatprep.subr.mxu0 0.0
    %574 = vmatpush1.msra.mxu0 0.0
    %575 = vmatprep.subr.mxu0 0.0
    %576 = vmatpush1.msra.mxu0 0.0
    %577 = vmatprep.subr.mxu0 0.0
    %578 = vmatpush1.msra.mxu0 0.0
    %579 = vmatprep.subr.mxu0 0.0
    %580 = vmatpush1.msra.mxu0 0.0
    %581 = vmatprep.subr.mxu0 0.0
    %582 = vmatpush1.msra.mxu0 0.0
    %583 = vmatprep.subr.mxu0 0.0
    %584 = vmatpush1.msra.mxu0 0.0
    %585 = vmatprep.subr.mxu0 0.0
    %586 = vmatpush1.msra.mxu0 0.0
    %587 = vmatprep.subr.mxu0 0.0
    %588 = vmatpush1.msra.mxu0 0.0
    %589 = vmatprep.subr.mxu0 0.0
    %590 = vmatpush1.msra.mxu0 0.0
    %591 = vmatprep.subr.mxu0 0.0
    %592 = vmatpush1.msra.mxu0 0.0
    %593 = vmatprep.subr.mxu0 0.0
    %594 = vmatpush1.msra.mxu0 0.0
    %595 = vmatprep.subr.mxu0 0.0
    %596 = vmatpush1.msra.mxu0 0.0
    %597 = vmatprep.subr.mxu0 0.0
    %598 = vmatpush1.msra.mxu0 0.0
    %599 = vmatprep.mubr.f32.mxu0 0.0
    %600 = vmatmul.mubr.f32.gmra.mrb[0].mxu0 %v529
    %v601 = vpop.f32.mrb[0].mxu0
    %v602 = vadd.f32 %v515, %v601
    %v603 = vpop.f32.mrb[0].mxu0
    %604 = vdwg.mxu0
    %v606 = vsel %vm358, %v457, 0
    %v609 = vsel %vm531, %v485, 0
    %611 = vmatprep.subr.mxu0 0.0
    %612 = vmatpush1.msra.mxu0 %v473
    %613 = vmatprep.subr.mxu0 0.0
    %614 = vmatpush1.msra.mxu0 %v474
    %615 = vmatprep.subr.mxu0 0.0
    %616 = vmatpush1.msra.mxu0 %v475
    %617 = vmatprep.subr.mxu0 0.0
    %618 = vmatpush1.msra.mxu0 %v476
    %619 = vmatprep.subr.mxu0 0.0
    %620 = vmatpush1.msra.mxu0 %v477
    %621 = vmatprep.subr.mxu0 0.0
    %622 = vmatpush1.msra.mxu0 %v478
    %623 = vmatprep.subr.mxu0 0.0
    %624 = vmatpush1.msra.mxu0 %v479
    %625 = vmatprep.subr.mxu0 0.0
    %626 = vmatpush1.msra.mxu0 %v480
    %627 = vmatprep.subr.mxu0 0.0
    %628 = vmatpush1.msra.mxu0 %v481
    %629 = vmatprep.subr.mxu0 0.0
    %630 = vmatpush1.msra.mxu0 %v482
    %631 = vmatprep.subr.mxu0 0.0
    %632 = vmatpush1.msra.mxu0 %v483
    %633 = vmatprep.subr.mxu0 0.0
    %634 = vmatpush1.msra.mxu0 %v484
    %635 = vmatprep.subr.mxu0 0.0
    %636 = vmatpush1.msra.mxu0 %v609
    %637 = vmatprep.subr.mxu0 0.0
    %638 = vmatpush1.msra.mxu0 0.0
    %639 = vmatprep.subr.mxu0 0.0
    %640 = vmatpush1.msra.mxu0 0.0
    %641 = vmatprep.subr.mxu0 0.0
    %642 = vmatpush1.msra.mxu0 0.0
    %643 = vmatprep.subr.mxu0 0.0
    %644 = vmatpush1.msra.mxu0 0.0
    %645 = vmatprep.subr.mxu0 0.0
    %646 = vmatpush1.msra.mxu0 0.0
    %647 = vmatprep.subr.mxu0 0.0
    %648 = vmatpush1.msra.mxu0 0.0
    %649 = vmatprep.subr.mxu0 0.0
    %650 = vmatpush1.msra.mxu0 0.0
    %651 = vmatprep.subr.mxu0 0.0
    %652 = vmatpush1.msra.mxu0 0.0
    %653 = vmatprep.subr.mxu0 0.0
    %654 = vmatpush1.msra.mxu0 0.0
    %655 = vmatprep.subr.mxu0 0.0
    %656 = vmatpush1.msra.mxu0 0.0
    %657 = vmatprep.subr.mxu0 0.0
    %658 = vmatpush1.msra.mxu0 0.0
    %659 = vmatprep.subr.mxu0 0.0
    %660 = vmatpush1.msra.mxu0 0.0
    %661 = vmatprep.subr.mxu0 0.0
    %662 = vmatpush1.msra.mxu0 0.0
    %663 = vmatprep.subr.mxu0 0.0
    %664 = vmatpush1.msra.mxu0 0.0
    %665 = vmatprep.subr.mxu0 0.0
    %666 = vmatpush1.msra.mxu0 0.0
    %667 = vmatprep.subr.mxu0 0.0
    %668 = vmatpush1.msra.mxu0 0.0
    %669 = vmatprep.subr.mxu0 0.0
    %670 = vmatpush1.msra.mxu0 0.0
    %671 = vmatprep.subr.mxu0 0.0
    %672 = vmatpush1.msra.mxu0 0.0
    %673 = vmatprep.subr.mxu0 0.0
    %674 = vmatpush1.msra.mxu0 0.0
    %675 = vmatprep.mubr.f32.mxu0 0.0
    %676 = vmatmul.mubr.f32.gmra.mrb[0].mxu0 %v606
    %v677 = vpop.f32.mrb[0].mxu0
    %v678 = vadd.f32 %v519, %v677
    %v679 = vpop.f32.mrb[0].mxu0
    %680 = vdwg.mxu0
    %v682 = vsel %vm358, %v458, 0
    %v685 = vsel %vm531, %v498, 0
    %687 = vmatprep.subr.mxu0 0.0
    %688 = vmatpush1.msra.mxu0 %v486
    %689 = vmatprep.subr.mxu0 0.0
    %690 = vmatpush1.msra.mxu0 %v487
    %691 = vmatprep.subr.mxu0 0.0
    %692 = vmatpush1.msra.mxu0 %v488
    %693 = vmatprep.subr.mxu0 0.0
    %694 = vmatpush1.msra.mxu0 %v489
    %695 = vmatprep.subr.mxu0 0.0
    %696 = vmatpush1.msra.mxu0 %v490
    %697 = vmatprep.subr.mxu0 0.0
    %698 = vmatpush1.msra.mxu0 %v491
    %699 = vmatprep.subr.mxu0 0.0
    %700 = vmatpush1.msra.mxu0 %v492
    %701 = vmatprep.subr.mxu0 0.0
    %702 = vmatpush1.msra.mxu0 %v493
    %703 = vmatprep.subr.mxu0 0.0
    %704 = vmatpush1.msra.mxu0 %v494
    %705 = vmatprep.subr.mxu0 0.0
    %706 = vmatpush1.msra.mxu0 %v495
    %707 = vmatprep.subr.mxu0 0.0
    %708 = vmatpush1.msra.mxu0 %v496
    %709 = vmatprep.subr.mxu0 0.0
    %710 = vmatpush1.msra.mxu0 %v497
    %711 = vmatprep.subr.mxu0 0.0
    %712 = vmatpush1.msra.mxu0 %v685
    %713 = vmatprep.subr.mxu0 0.0
    %714 = vmatpush1.msra.mxu0 0.0
    %715 = vmatprep.subr.mxu0 0.0
    %716 = vmatpush1.msra.mxu0 0.0
    %717 = vmatprep.subr.mxu0 0.0
    %718 = vmatpush1.msra.mxu0 0.0
    %719 = vmatprep.subr.mxu0 0.0
    %720 = vmatpush1.msra.mxu0 0.0
    %721 = vmatprep.subr.mxu0 0.0
    %722 = vmatpush1.msra.mxu0 0.0
    %723 = vmatprep.subr.mxu0 0.0
    %724 = vmatpush1.msra.mxu0 0.0
    %725 = vmatprep.subr.mxu0 0.0
    %726 = vmatpush1.msra.mxu0 0.0
    %727 = vmatprep.subr.mxu0 0.0
    %728 = vmatpush1.msra.mxu0 0.0
    %729 = vmatprep.subr.mxu0 0.0
    %730 = vmatpush1.msra.mxu0 0.0
    %731 = vmatprep.subr.mxu0 0.0
    %732 = vmatpush1.msra.mxu0 0.0
    %733 = vmatprep.subr.mxu0 0.0
    %734 = vmatpush1.msra.mxu0 0.0
    %735 = vmatprep.subr.mxu0 0.0
    %736 = vmatpush1.msra.mxu0 0.0
    %737 = vmatprep.subr.mxu0 0.0
    %738 = vmatpush1.msra.mxu0 0.0
    %739 = vmatprep.subr.mxu0 0.0
    %740 = vmatpush1.msra.mxu0 0.0
    %741 = vmatprep.subr.mxu0 0.0
    %742 = vmatpush1.msra.mxu0 0.0
    %743 = vmatprep.subr.mxu0 0.0
    %744 = vmatpush1.msra.mxu0 0.0
    %745 = vmatprep.subr.mxu0 0.0
    %746 = vmatpush1.msra.mxu0 0.0
    %747 = vmatprep.subr.mxu0 0.0
    %748 = vmatpush1.msra.mxu0 0.0
    %749 = vmatprep.subr.mxu0 0.0
    %750 = vmatpush1.msra.mxu0 0.0
    %751 = vmatprep.mubr.f32.mxu0 0.0
    %752 = vmatmul.mubr.f32.gmra.mrb[0].mxu0 %v682
    %v753 = vpop.f32.mrb[0].mxu0
    %v754 = vadd.f32 %v523, %v753
    %v755 = vpop.f32.mrb[0].mxu0
    %756 = vdwg.mxu0
    %v758 = vsel %vm358, %v459, 0
    %v761 = vsel %vm531, %v511, 0
    %763 = vmatprep.subr.mxu0 0.0
    %764 = vmatpush1.msra.mxu0 %v499
    %765 = vmatprep.subr.mxu0 0.0
    %766 = vmatpush1.msra.mxu0 %v500
    %767 = vmatprep.subr.mxu0 0.0
    %768 = vmatpush1.msra.mxu0 %v501
    %769 = vmatprep.subr.mxu0 0.0
    %770 = vmatpush1.msra.mxu0 %v502
    %771 = vmatprep.subr.mxu0 0.0
    %772 = vmatpush1.msra.mxu0 %v503
    %773 = vmatprep.subr.mxu0 0.0
    %774 = vmatpush1.msra.mxu0 %v504
    %775 = vmatprep.subr.mxu0 0.0
    %776 = vmatpush1.msra.mxu0 %v505
    %777 = vmatprep.subr.mxu0 0.0
    %778 = vmatpush1.msra.mxu0 %v506
    %779 = vmatprep.subr.mxu0 0.0
    %780 = vmatpush1.msra.mxu0 %v507
    %781 = vmatprep.subr.mxu0 0.0
    %782 = vmatpush1.msra.mxu0 %v508
    %783 = vmatprep.subr.mxu0 0.0
    %784 = vmatpush1.msra.mxu0 %v509
    %785 = vmatprep.subr.mxu0 0.0
    %786 = vmatpush1.msra.mxu0 %v510
    %787 = vmatprep.subr.mxu0 0.0
    %788 = vmatpush1.msra.mxu0 %v761
    %789 = vmatprep.subr.mxu0 0.0
    %790 = vmatpush1.msra.mxu0 0.0
    %791 = vmatprep.subr.mxu0 0.0
    %792 = vmatpush1.msra.mxu0 0.0
    %793 = vmatprep.subr.mxu0 0.0
    %794 = vmatpush1.msra.mxu0 0.0
    %795 = vmatprep.subr.mxu0 0.0
    %796 = vmatpush1.msra.mxu0 0.0
    %797 = vmatprep.subr.mxu0 0.0
    %798 = vmatpush1.msra.mxu0 0.0
    %799 = vmatprep.subr.mxu0 0.0
    %800 = vmatpush1.msra.mxu0 0.0
    %801 = vmatprep.subr.mxu0 0.0
    %802 = vmatpush1.msra.mxu0 0.0
    %803 = vmatprep.subr.mxu0 0.0
    %804 = vmatpush1.msra.mxu0 0.0
    %805 = vmatprep.subr.mxu0 0.0
    %806 = vmatpush1.msra.mxu0 0.0
    %807 = vmatprep.subr.mxu0 0.0
    %808 = vmatpush1.msra.mxu0 0.0
    %809 = vmatprep.subr.mxu0 0.0
    %810 = vmatpush1.msra.mxu0 0.0
    %811 = vmatprep.subr.mxu0 0.0
    %812 = vmatpush1.msra.mxu0 0.0
    %813 = vmatprep.subr.mxu0 0.0
    %814 = vmatpush1.msra.mxu0 0.0
    %815 = vmatprep.subr.mxu0 0.0
    %816 = vmatpush1.msra.mxu0 0.0
    %817 = vmatprep.subr.mxu0 0.0
    %818 = vmatpush1.msra.mxu0 0.0
    %819 = vmatprep.subr.mxu0 0.0
    %820 = vmatpush1.msra.mxu0 0.0
    %821 = vmatprep.subr.mxu0 0.0
    %822 = vmatpush1.msra.mxu0 0.0
    %823 = vmatprep.subr.mxu0 0.0
    %824 = vmatpush1.msra.mxu0 0.0
    %825 = vmatprep.subr.mxu0 0.0
    %826 = vmatpush1.msra.mxu0 0.0
    %827 = vmatprep.mubr.f32.mxu0 0.0
    %828 = vmatmul.mubr.f32.gmra.mrb[0].mxu0 %v758
    %v829 = vpop.f32.mrb[0].mxu0
    %v830 = vadd.f32 %v527, %v829
    %v831 = vpop.f32.mrb[0].mxu0
    %832 = vdwg.mxu0
    %vm833 = vcmp.gt.f32.partialorder %v602, 0.0
    %vm834 = vcmp.gt.f32.partialorder %v678, 0.0
    %vm835 = vcmp.gt.f32.partialorder %v754, 0.0
    %vm836 = vcmp.gt.f32.partialorder %v830, 0.0
    %v837 = vmul.f32 %v602, 0.01
    %v838 = vmul.f32 %v678, 0.01
    %v839 = vmul.f32 %v754, 0.01
    %v840 = vmul.f32 %v830, 0.01
    %v841 = vsel %vm833, %v602, %v837
    %v842 = vsel %vm834, %v678, %v838
    %v843 = vsel %vm835, %v754, %v839
    %v844 = vsel %vm836, %v830, %v840
    %v845 = vsel %vm358, %v841, 0.0
    %846 = vadd.xlane.f32.xlu0 %v845
    %v847 = vpop.xlane.xlu0 %846
    %v848 = vsel %vm358, %v842, 0.0
    %849 = vadd.xlane.f32.xlu0 %v848
    %v850 = vpop.xlane.xlu0 %849
    %v851 = vsel %vm358, %v843, 0.0
    %852 = vadd.xlane.f32.xlu0 %v851
    %v853 = vpop.xlane.xlu0 %852
    %v854 = vsel %vm358, %v844, 0.0
    %855 = vadd.xlane.f32.xlu0 %v854
    %v856 = vpop.xlane.xlu0 %855
    %v857 = vmul.f32 %v847, %v371
    %v858 = vmul.f32 %v850, %v371
    %v859 = vmul.f32 %v853, %v371
    %v860 = vmul.f32 %v856, %v371
    %v861 = vmul.f32 %v841, %v841
    %v862 = vmul.f32 %v842, %v842
    %v863 = vmul.f32 %v843, %v843
    %v864 = vmul.f32 %v844, %v844
    %v865 = vsel %vm358, %v861, 0.0
    %866 = vadd.xlane.f32.xlu0 %v865
    %v867 = vpop.xlane.xlu0 %866
    %v868 = vsel %vm358, %v862, 0.0
    %869 = vadd.xlane.f32.xlu0 %v868
    %v870 = vpop.xlane.xlu0 %869
    %v871 = vsel %vm358, %v863, 0.0
    %872 = vadd.xlane.f32.xlu0 %v871
    %v873 = vpop.xlane.xlu0 %872
    %v874 = vsel %vm358, %v864, 0.0
    %875 = vadd.xlane.f32.xlu0 %v874
    %v876 = vpop.xlane.xlu0 %875
    %v877 = vmul.f32 %v867, %v371
    %v878 = vmul.f32 %v870, %v371
    %v879 = vmul.f32 %v873, %v371
    %v880 = vmul.f32 %v876, %v371
    %v881 = vmul.f32 %v857, %v857
    %v882 = vmul.f32 %v858, %v858
    %v883 = vmul.f32 %v859, %v859
    %v884 = vmul.f32 %v860, %v860
    %v885 = vsub.f32 %v877, %v881
    %v886 = vsub.f32 %v878, %v882
    %v887 = vsub.f32 %v879, %v883
    %v888 = vsub.f32 %v880, %v884
    %v889 = vadd.f32 %v885, 1e-05
    %v890 = vadd.f32 %v886, 1e-05
    %v891 = vadd.f32 %v887, 1e-05
    %v892 = vadd.f32 %v888, 1e-05
    %v893 = vrsqrt.pop %v889
    %v894 = vrsqrt.pop %v890
    %v895 = vrsqrt.pop %v891
    %v896 = vrsqrt.pop %v892
    %v897 = vsub.f32 %v841, %v857
    %v898 = vsub.f32 %v842, %v858
    %v899 = vsub.f32 %v843, %v859
    %v900 = vsub.f32 %v844, %v860
    %v901 = vmul.f32 %v897, %v893
    %v902 = vmul.f32 %v898, %v894
    %v903 = vmul.f32 %v899, %v895
    %v904 = vmul.f32 %v900, %v896
    %v905 = vlaneseq
    %v906 = vshrl.u32 %v905, 7
    %v907 = vsub.s32 4, %v906
    %v908 = vrot.slane %v21, %v907
    %v909 = vlaneseq
    %v910 = vshrl.u32 %v909, 7
    %v911 = vsub.s32 4, %v910
    %v912 = vrot.slane %v22, %v911
    %v913 = vlaneseq
    %v914 = vshrl.u32 %v913, 7
    %v915 = vsub.s32 4, %v914
    %v916 = vrot.slane %v23, %v915
    %v917 = vlaneseq
    %v918 = vshrl.u32 %v917, 7
    %v919 = vsub.s32 4, %v918
    %v920 = vrot.slane %v24, %v919
    %v921 = vmul.f32 %v901, %v908
    %v922 = vmul.f32 %v902, %v912
    %v923 = vmul.f32 %v903, %v916
    %v924 = vmul.f32 %v904, %v920
    %v925 = vlaneseq
    %v926 = vshrl.u32 %v925, 7
    %v927 = vsub.s32 5, %v926
    %v928 = vrot.slane %v21, %v927
    %v929 = vlaneseq
    %v930 = vshrl.u32 %v929, 7
    %v931 = vsub.s32 5, %v930
    %v932 = vrot.slane %v22, %v931
    %v933 = vlaneseq
    %v934 = vshrl.u32 %v933, 7
    %v935 = vsub.s32 5, %v934
    %v936 = vrot.slane %v23, %v935
    %v937 = vlaneseq
    %v938 = vshrl.u32 %v937, 7
    %v939 = vsub.s32 5, %v938
    %v940 = vrot.slane %v24, %v939
    %v941 = vadd.f32 %v921, %v928
    %v942 = vadd.f32 %v922, %v932
    %v943 = vadd.f32 %v923, %v936
    %v944 = vadd.f32 %v924, %v940
    %v945 = vld [vmem:[%s3] sm:$0xff]
    %v946 = vld [vmem:[%s3 + $0x8] sm:$0xff]
    %v947 = vld [vmem:[%s3 + $0x10] sm:$0xff]
    %v948 = vld [vmem:[%s3 + $0x18] sm:$0xff]
    %v949 = vld [vmem:[%s3 + $0x20] sm:$0xff]
    %v950 = vld [vmem:[%s3 + $0x28] sm:$0xff]
    %v951 = vld [vmem:[%s3 + $0x30] sm:$0xff]
    %v952 = vld [vmem:[%s3 + $0x38] sm:$0xff]
    %v953 = vld [vmem:[%s3 + $0x40] sm:$0xff]
    %v954 = vld [vmem:[%s3 + $0x48] sm:$0xff]
    %v955 = vld [vmem:[%s3 + $0x50] sm:$0xff]
    %v956 = vld [vmem:[%s3 + $0x58] sm:$0xff]
    %v957 = vld [vmem:[%s3 + $0x60] sm:$0xf]
    %v958 = vld [vmem:[%s3 + $0x68] sm:$0xff]
    %v959 = vld [vmem:[%s3 + $0x70] sm:$0xff]
    %v960 = vld [vmem:[%s3 + $0x78] sm:$0xff]
    %v961 = vld [vmem:[%s3 + $0x80] sm:$0xff]
    %v962 = vld [vmem:[%s3 + $0x88] sm:$0xff]
    %v963 = vld [vmem:[%s3 + $0x90] sm:$0xff]
    %v964 = vld [vmem:[%s3 + $0x98] sm:$0xff]
    %v965 = vld [vmem:[%s3 + $0xa0] sm:$0xff]
    %v966 = vld [vmem:[%s3 + $0xa8] sm:$0xff]
    %v967 = vld [vmem:[%s3 + $0xb0] sm:$0xff]
    %v968 = vld [vmem:[%s3 + $0xb8] sm:$0xff]
    %v969 = vld [vmem:[%s3 + $0xc0] sm:$0xff]
    %v970 = vld [vmem:[%s3 + $0xc8] sm:$0xf]
    %v971 = vld [vmem:[%s3 + $0xd0] sm:$0xff]
    %v972 = vld [vmem:[%s3 + $0xd8] sm:$0xff]
    %v973 = vld [vmem:[%s3 + $0xe0] sm:$0xff]
    %v974 = vld [vmem:[%s3 + $0xe8] sm:$0xff]
    %v975 = vld [vmem:[%s3 + $0xf0] sm:$0xff]
    %v976 = vld [vmem:[%s3 + $0xf8] sm:$0xff]
    %v977 = vld [vmem:[%s3 + $0x100] sm:$0xff]
    %v978 = vld [vmem:[%s3 + $0x108] sm:$0xff]
    %v979 = vld [vmem:[%s3 + $0x110] sm:$0xff]
    %v980 = vld [vmem:[%s3 + $0x118] sm:$0xff]
    %v981 = vld [vmem:[%s3 + $0x120] sm:$0xff]
    %v982 = vld [vmem:[%s3 + $0x128] sm:$0xff]
    %v983 = vld [vmem:[%s3 + $0x130] sm:$0xf]
    %v984 = vld [vmem:[%s3 + $0x138] sm:$0xff]
    %v985 = vld [vmem:[%s3 + $0x140] sm:$0xff]
    %v986 = vld [vmem:[%s3 + $0x148] sm:$0xff]
    %v987 = vld [vmem:[%s3 + $0x150] sm:$0xff]
    %v988 = vld [vmem:[%s3 + $0x158] sm:$0xff]
    %v989 = vld [vmem:[%s3 + $0x160] sm:$0xff]
    %v990 = vld [vmem:[%s3 + $0x168] sm:$0xff]
    %v991 = vld [vmem:[%s3 + $0x170] sm:$0xff]
    %v992 = vld [vmem:[%s3 + $0x178] sm:$0xff]
    %v993 = vld [vmem:[%s3 + $0x180] sm:$0xff]
    %v994 = vld [vmem:[%s3 + $0x188] sm:$0xff]
    %v995 = vld [vmem:[%s3 + $0x190] sm:$0xff]
    %v996 = vld [vmem:[%s3 + $0x198] sm:$0xf]
    %v997 = vlaneseq
    %v998 = vshrl.u32 %v997, 7
    %v999 = vsub.s32 6, %v998
    %v1000 = vrot.slane %v21, %v999
    %v1001 = vlaneseq
    %v1002 = vshrl.u32 %v1001, 7
    %v1003 = vsub.s32 6, %v1002
    %v1004 = vrot.slane %v22, %v1003
    %v1005 = vlaneseq
    %v1006 = vshrl.u32 %v1005, 7
    %v1007 = vsub.s32 6, %v1006
    %v1008 = vrot.slane %v23, %v1007
    %v1009 = vlaneseq
    %v1010 = vshrl.u32 %v1009, 7
    %v1011 = vsub.s32 6, %v1010
    %v1012 = vrot.slane %v24, %v1011
    %v1014 = vsel %vm358, %v941, 0
    %v1017 = vsel %vm531, %v957, 0
    %1019 = vmatprep.subr.mxu0 0.0
    %1020 = vmatpush1.msra.mxu0 %v945
    %1021 = vmatprep.subr.mxu0 0.0
    %1022 = vmatpush1.msra.mxu0 %v946
    %1023 = vmatprep.subr.mxu0 0.0
    %1024 = vmatpush1.msra.mxu0 %v947
    %1025 = vmatprep.subr.mxu0 0.0
    %1026 = vmatpush1.msra.mxu0 %v948
    %1027 = vmatprep.subr.mxu0 0.0
    %1028 = vmatpush1.msra.mxu0 %v949
    %1029 = vmatprep.subr.mxu0 0.0
    %1030 = vmatpush1.msra.mxu0 %v950
    %1031 = vmatprep.subr.mxu0 0.0
    %1032 = vmatpush1.msra.mxu0 %v951
    %1033 = vmatprep.subr.mxu0 0.0
    %1034 = vmatpush1.msra.mxu0 %v952
    %1035 = vmatprep.subr.mxu0 0.0
    %1036 = vmatpush1.msra.mxu0 %v953
    %1037 = vmatprep.subr.mxu0 0.0
    %1038 = vmatpush1.msra.mxu0 %v954
    %1039 = vmatprep.subr.mxu0 0.0
    %1040 = vmatpush1.msra.mxu0 %v955
    %1041 = vmatprep.subr.mxu0 0.0
    %1042 = vmatpush1.msra.mxu0 %v956
    %1043 = vmatprep.subr.mxu0 0.0
    %1044 = vmatpush1.msra.mxu0 %v1017
    %1045 = vmatprep.subr.mxu0 0.0
    %1046 = vmatpush1.msra.mxu0 0.0
    %1047 = vmatprep.subr.mxu0 0.0
    %1048 = vmatpush1.msra.mxu0 0.0
    %1049 = vmatprep.subr.mxu0 0.0
    %1050 = vmatpush1.msra.mxu0 0.0
    %1051 = vmatprep.subr.mxu0 0.0
    %1052 = vmatpush1.msra.mxu0 0.0
    %1053 = vmatprep.subr.mxu0 0.0
    %1054 = vmatpush1.msra.mxu0 0.0
    %1055 = vmatprep.subr.mxu0 0.0
    %1056 = vmatpush1.msra.mxu0 0.0
    %1057 = vmatprep.subr.mxu0 0.0
    %1058 = vmatpush1.msra.mxu0 0.0
    %1059 = vmatprep.subr.mxu0 0.0
    %1060 = vmatpush1.msra.mxu0 0.0
    %1061 = vmatprep.subr.mxu0 0.0
    %1062 = vmatpush1.msra.mxu0 0.0
    %1063 = vmatprep.subr.mxu0 0.0
    %1064 = vmatpush1.msra.mxu0 0.0
    %1065 = vmatprep.subr.mxu0 0.0
    %1066 = vmatpush1.msra.mxu0 0.0
    %1067 = vmatprep.subr.mxu0 0.0
    %1068 = vmatpush1.msra.mxu0 0.0
    %1069 = vmatprep.subr.mxu0 0.0
    %1070 = vmatpush1.msra.mxu0 0.0
    %1071 = vmatprep.subr.mxu0 0.0
    %1072 = vmatpush1.msra.mxu0 0.0
    %1073 = vmatprep.subr.mxu0 0.0
    %1074 = vmatpush1.msra.mxu0 0.0
    %1075 = vmatprep.subr.mxu0 0.0
    %1076 = vmatpush1.msra.mxu0 0.0
    %1077 = vmatprep.subr.mxu0 0.0
    %1078 = vmatpush1.msra.mxu0 0.0
    %1079 = vmatprep.subr.mxu0 0.0
    %1080 = vmatpush1.msra.mxu0 0.0
    %1081 = vmatprep.subr.mxu0 0.0
    %1082 = vmatpush1.msra.mxu0 0.0
    %1083 = vmatprep.mubr.f32.mxu0 0.0
    %1084 = vmatmul.mubr.f32.gmra.mrb[0].mxu0 %v1014
    %v1085 = vpop.f32.mrb[0].mxu0
    %v1086 = vadd.f32 %v1000, %v1085
    %v1087 = vpop.f32.mrb[0].mxu0
    %1088 = vdwg.mxu0
    %v1090 = vsel %vm358, %v942, 0
    %v1093 = vsel %vm531, %v970, 0
    %1095 = vmatprep.subr.mxu0 0.0
    %1096 = vmatpush1.msra.mxu0 %v958
    %1097 = vmatprep.subr.mxu0 0.0
    %1098 = vmatpush1.msra.mxu0 %v959
    %1099 = vmatprep.subr.mxu0 0.0
    %1100 = vmatpush1.msra.mxu0 %v960
    %1101 = vmatprep.subr.mxu0 0.0
    %1102 = vmatpush1.msra.mxu0 %v961
    %1103 = vmatprep.subr.mxu0 0.0
    %1104 = vmatpush1.msra.mxu0 %v962
    %1105 = vmatprep.subr.mxu0 0.0
    %1106 = vmatpush1.msra.mxu0 %v963
    %1107 = vmatprep.subr.mxu0 0.0
    %1108 = vmatpush1.msra.mxu0 %v964
    %1109 = vmatprep.subr.mxu0 0.0
    %1110 = vmatpush1.msra.mxu0 %v965
    %1111 = vmatprep.subr.mxu0 0.0
    %1112 = vmatpush1.msra.mxu0 %v966
    %1113 = vmatprep.subr.mxu0 0.0
    %1114 = vmatpush1.msra.mxu0 %v967
    %1115 = vmatprep.subr.mxu0 0.0
    %1116 = vmatpush1.msra.mxu0 %v968
    %1117 = vmatprep.subr.mxu0 0.0
    %1118 = vmatpush1.msra.mxu0 %v969
    %1119 = vmatprep.subr.mxu0 0.0
    %1120 = vmatpush1.msra.mxu0 %v1093
    %1121 = vmatprep.subr.mxu0 0.0
    %1122 = vmatpush1.msra.mxu0 0.0
    %1123 = vmatprep.subr.mxu0 0.0
    %1124 = vmatpush1.msra.mxu0 0.0
    %1125 = vmatprep.subr.mxu0 0.0
    %1126 = vmatpush1.msra.mxu0 0.0
    %1127 = vmatprep.subr.mxu0 0.0
    %1128 = vmatpush1.msra.mxu0 0.0
    %1129 = vmatprep.subr.mxu0 0.0
    %1130 = vmatpush1.msra.mxu0 0.0
    %1131 = vmatprep.subr.mxu0 0.0
    %1132 = vmatpush1.msra.mxu0 0.0
    %1133 = vmatprep.subr.mxu0 0.0
    %1134 = vmatpush1.msra.mxu0 0.0
    %1135 = vmatprep.subr.mxu0 0.0
    %1136 = vmatpush1.msra.mxu0 0.0
    %1137 = vmatprep.subr.mxu0 0.0
    %1138 = vmatpush1.msra.mxu0 0.0
    %1139 = vmatprep.subr.mxu0 0.0
    %1140 = vmatpush1.msra.mxu0 0.0
    %1141 = vmatprep.subr.mxu0 0.0
    %1142 = vmatpush1.msra.mxu0 0.0
    %1143 = vmatprep.subr.mxu0 0.0
    %1144 = vmatpush1.msra.mxu0 0.0
    %1145 = vmatprep.subr.mxu0 0.0
    %1146 = vmatpush1.msra.mxu0 0.0
    %1147 = vmatprep.subr.mxu0 0.0
    %1148 = vmatpush1.msra.mxu0 0.0
    %1149 = vmatprep.subr.mxu0 0.0
    %1150 = vmatpush1.msra.mxu0 0.0
    %1151 = vmatprep.subr.mxu0 0.0
    %1152 = vmatpush1.msra.mxu0 0.0
    %1153 = vmatprep.subr.mxu0 0.0
    %1154 = vmatpush1.msra.mxu0 0.0
    %1155 = vmatprep.subr.mxu0 0.0
    %1156 = vmatpush1.msra.mxu0 0.0
    %1157 = vmatprep.subr.mxu0 0.0
    %1158 = vmatpush1.msra.mxu0 0.0
    %1159 = vmatprep.mubr.f32.mxu0 0.0
    %1160 = vmatmul.mubr.f32.gmra.mrb[0].mxu0 %v1090
    %v1161 = vpop.f32.mrb[0].mxu0
    %v1162 = vadd.f32 %v1004, %v1161
    %v1163 = vpop.f32.mrb[0].mxu0
    %1164 = vdwg.mxu0
    %v1166 = vsel %vm358, %v943, 0
    %v1169 = vsel %vm531, %v983, 0
    %1171 = vmatprep.subr.mxu0 0.0
    %1172 = vmatpush1.msra.mxu0 %v971
    %1173 = vmatprep.subr.mxu0 0.0
    %1174 = vmatpush1.msra.mxu0 %v972
    %1175 = vmatprep.subr.mxu0 0.0
    %1176 = vmatpush1.msra.mxu0 %v973
    %1177 = vmatprep.subr.mxu0 0.0
    %1178 = vmatpush1.msra.mxu0 %v974
    %1179 = vmatprep.subr.mxu0 0.0
    %1180 = vmatpush1.msra.mxu0 %v975
    %1181 = vmatprep.subr.mxu0 0.0
    %1182 = vmatpush1.msra.mxu0 %v976
    %1183 = vmatprep.subr.mxu0 0.0
    %1184 = vmatpush1.msra.mxu0 %v977
    %1185 = vmatprep.subr.mxu0 0.0
    %1186 = vmatpush1.msra.mxu0 %v978
    %1187 = vmatprep.subr.mxu0 0.0
    %1188 = vmatpush1.msra.mxu0 %v979
    %1189 = vmatprep.subr.mxu0 0.0
    %1190 = vmatpush1.msra.mxu0 %v980
    %1191 = vmatprep.subr.mxu0 0.0
    %1192 = vmatpush1.msra.mxu0 %v981
    %1193 = vmatprep.subr.mxu0 0.0
    %1194 = vmatpush1.msra.mxu0 %v982
    %1195 = vmatprep.subr.mxu0 0.0
    %1196 = vmatpush1.msra.mxu0 %v1169
    %1197 = vmatprep.subr.mxu0 0.0
    %1198 = vmatpush1.msra.mxu0 0.0
    %1199 = vmatprep.subr.mxu0 0.0
    %1200 = vmatpush1.msra.mxu0 0.0
    %1201 = vmatprep.subr.mxu0 0.0
    %1202 = vmatpush1.msra.mxu0 0.0
    %1203 = vmatprep.subr.mxu0 0.0
    %1204 = vmatpush1.msra.mxu0 0.0
    %1205 = vmatprep.subr.mxu0 0.0
    %1206 = vmatpush1.msra.mxu0 0.0
    %1207 = vmatprep.subr.mxu0 0.0
    %1208 = vmatpush1.msra.mxu0 0.0
    %1209 = vmatprep.subr.mxu0 0.0
    %1210 = vmatpush1.msra.mxu0 0.0
    %1211 = vmatprep.subr.mxu0 0.0
    %1212 = vmatpush1.msra.mxu0 0.0
    %1213 = vmatprep.subr.mxu0 0.0
    %1214 = vmatpush1.msra.mxu0 0.0
    %1215 = vmatprep.subr.mxu0 0.0
    %1216 = vmatpush1.msra.mxu0 0.0
    %1217 = vmatprep.subr.mxu0 0.0
    %1218 = vmatpush1.msra.mxu0 0.0
    %1219 = vmatprep.subr.mxu0 0.0
    %1220 = vmatpush1.msra.mxu0 0.0
    %1221 = vmatprep.subr.mxu0 0.0
    %1222 = vmatpush1.msra.mxu0 0.0
    %1223 = vmatprep.subr.mxu0 0.0
    %1224 = vmatpush1.msra.mxu0 0.0
    %1225 = vmatprep.subr.mxu0 0.0
    %1226 = vmatpush1.msra.mxu0 0.0
    %1227 = vmatprep.subr.mxu0 0.0
    %1228 = vmatpush1.msra.mxu0 0.0
    %1229 = vmatprep.subr.mxu0 0.0
    %1230 = vmatpush1.msra.mxu0 0.0
    %1231 = vmatprep.subr.mxu0 0.0
    %1232 = vmatpush1.msra.mxu0 0.0
    %1233 = vmatprep.subr.mxu0 0.0
    %1234 = vmatpush1.msra.mxu0 0.0
    %1235 = vmatprep.mubr.f32.mxu0 0.0
    %1236 = vmatmul.mubr.f32.gmra.mrb[0].mxu0 %v1166
    %v1237 = vpop.f32.mrb[0].mxu0
    %v1238 = vadd.f32 %v1008, %v1237
    %v1239 = vpop.f32.mrb[0].mxu0
    %1240 = vdwg.mxu0
    %v1242 = vsel %vm358, %v944, 0
    %v1245 = vsel %vm531, %v996, 0
    %1247 = vmatprep.subr.mxu0 0.0
    %1248 = vmatpush1.msra.mxu0 %v984
    %1249 = vmatprep.subr.mxu0 0.0
    %1250 = vmatpush1.msra.mxu0 %v985
    %1251 = vmatprep.subr.mxu0 0.0
    %1252 = vmatpush1.msra.mxu0 %v986
    %1253 = vmatprep.subr.mxu0 0.0
    %1254 = vmatpush1.msra.mxu0 %v987
    %1255 = vmatprep.subr.mxu0 0.0
    %1256 = vmatpush1.msra.mxu0 %v988
    %1257 = vmatprep.subr.mxu0 0.0
    %1258 = vmatpush1.msra.mxu0 %v989
    %1259 = vmatprep.subr.mxu0 0.0
    %1260 = vmatpush1.msra.mxu0 %v990
    %1261 = vmatprep.subr.mxu0 0.0
    %1262 = vmatpush1.msra.mxu0 %v991
    %1263 = vmatprep.subr.mxu0 0.0
    %1264 = vmatpush1.msra.mxu0 %v992
    %1265 = vmatprep.subr.mxu0 0.0
    %1266 = vmatpush1.msra.mxu0 %v993
    %1267 = vmatprep.subr.mxu0 0.0
    %1268 = vmatpush1.msra.mxu0 %v994
    %1269 = vmatprep.subr.mxu0 0.0
    %1270 = vmatpush1.msra.mxu0 %v995
    %1271 = vmatprep.subr.mxu0 0.0
    %1272 = vmatpush1.msra.mxu0 %v1245
    %1273 = vmatprep.subr.mxu0 0.0
    %1274 = vmatpush1.msra.mxu0 0.0
    %1275 = vmatprep.subr.mxu0 0.0
    %1276 = vmatpush1.msra.mxu0 0.0
    %1277 = vmatprep.subr.mxu0 0.0
    %1278 = vmatpush1.msra.mxu0 0.0
    %1279 = vmatprep.subr.mxu0 0.0
    %1280 = vmatpush1.msra.mxu0 0.0
    %1281 = vmatprep.subr.mxu0 0.0
    %1282 = vmatpush1.msra.mxu0 0.0
    %1283 = vmatprep.subr.mxu0 0.0
    %1284 = vmatpush1.msra.mxu0 0.0
    %1285 = vmatprep.subr.mxu0 0.0
    %1286 = vmatpush1.msra.mxu0 0.0
    %1287 = vmatprep.subr.mxu0 0.0
    %1288 = vmatpush1.msra.mxu0 0.0
    %1289 = vmatprep.subr.mxu0 0.0
    %1290 = vmatpush1.msra.mxu0 0.0
    %1291 = vmatprep.subr.mxu0 0.0
    %1292 = vmatpush1.msra.mxu0 0.0
    %1293 = vmatprep.subr.mxu0 0.0
    %1294 = vmatpush1.msra.mxu0 0.0
    %1295 = vmatprep.subr.mxu0 0.0
    %1296 = vmatpush1.msra.mxu0 0.0
    %1297 = vmatprep.subr.mxu0 0.0
    %1298 = vmatpush1.msra.mxu0 0.0
    %1299 = vmatprep.subr.mxu0 0.0
    %1300 = vmatpush1.msra.mxu0 0.0
    %1301 = vmatprep.subr.mxu0 0.0
    %1302 = vmatpush1.msra.mxu0 0.0
    %1303 = vmatprep.subr.mxu0 0.0
    %1304 = vmatpush1.msra.mxu0 0.0
    %1305 = vmatprep.subr.mxu0 0.0
    %1306 = vmatpush1.msra.mxu0 0.0
    %1307 = vmatprep.subr.mxu0 0.0
    %1308 = vmatpush1.msra.mxu0 0.0
    %1309 = vmatprep.subr.mxu0 0.0
    %1310 = vmatpush1.msra.mxu0 0.0
    %1311 = vmatprep.mubr.f32.mxu0 0.0
    %1312 = vmatmul.mubr.f32.gmra.mrb[0].mxu0 %v1242
    %v1313 = vpop.f32.mrb[0].mxu0
    %v1314 = vadd.f32 %v1012, %v1313
    %v1315 = vpop.f32.mrb[0].mxu0
    %1316 = vdwg.mxu0
    %vm1317 = vcmask 64512
    %1318 = vst.msk [vmem:[#allocation2] sm:$0xff] %vm1317, %v1086
    %1319 = vst.msk [vmem:[#allocation2 + $0x8] sm:$0xff] %vm1317, %v1162
    %1320 = vst.msk [vmem:[#allocation2 + $0x10] sm:$0xff] %vm1317, %v1238
    %1321 = vst.msk [vmem:[#allocation2 + $0x18] sm:$0xff] %vm1317, %v1314
    // Predicated region
    $region22: #{rt_nw_forward.1} parent=1 // pred_check
      _
    $region23: #{rt_nw_forward.1} parent=1 // pred_check_branch
      %1323 = sbr.rel (0) target = $region25
    $region24: #{rt_nw_forward.1} parent=1 // pred_region
      %s1325 = ssub.s32 512, 512
      %1326 = vsyncadd [#allocation3], %s1325
      %s1327 = sshll.u32 [#allocation2], 4
      %s1328 = int_to_ptr.vmem [resolvable:$true] %s1327
      %1333 = dma.vmem_to_hbm [thread:$0]  %s1328, 512, %s5, [#allocation3], 128, 128, 8
    $region25: #{rt_nw_forward.1} parent=1 // pred_fallthru
      _
    // Predicated region
    $region26: #{rt_nw_forward.1} parent=1 // pred_check
      _
    $region27: #{rt_nw_forward.1} parent=1 // pred_check_branch
      %1335 = sbr.rel (0) target = $region29
    $region28: #{rt_nw_forward.1} parent=1 // pred_region
      %1336 = dma.done [#allocation3], 512
    $region29: #{rt_nw_forward.1} parent=1 // pred_fallthru
      _
    %1337 = vsyncpa [#allocation3], 1

</llo_original>
